<compile_context>
chip_gen: v7x
topology: tpu7x:2x2x1
jax: 0.10.0
libtpu: 0.0.40
codegen_flags: <defaults>
</compile_context>

<pallas_src>
import math
from collections import namedtuple
from functools import partial

import jax
import jax.numpy as jnp
from jax.experimental import pallas as pl
from jax.experimental.pallas import tpu as pltpu

# ----------------------------------------------------------------------------
# Small synthetic configuration (mirrors FrozenArgs / model shapes, scaled down)
# ----------------------------------------------------------------------------
BATCH          = 2      # batch size
IMG_C, IMG_HW  = 3, 16  # pixel_values: (B, 3, 16, 16), NCHW like PyTorch
PATCH          = 8      # -> 2x2 = 4 patches
N_PATCHES      = (IMG_HW // PATCH) ** 2
VIS_HIDDEN     = 32     # stand-in for CLIP hidden_size (1024 in the real model)
LM_DIM         = 32     # stand-in for LM embedding dim
VOCAB          = 64     # stand-in for len(tokenizer)
SEQ            = 8      # caption length (labels)
N_VIS_TOKENS   = 1      # args.n_visual_tokens
SHARED_DIM     = 32     # args.shared_emb_dim (256 in the real model)
PAD_TOKEN_ID   = 1
RET_TOKEN_IDX  = 0      # args.retrieval_token_idx
LOGIT_SCALE    = math.log(1.0 / 0.07)   # nn.Parameter init in __init__

# ----- lane-dense padded dims (outputs / contractions padded to 128-multiples) -----
PATCH_FEAT = IMG_C * PATCH * PATCH   # 192
K_PAD      = 256                     # padded patch contraction dim
VIS_PAD    = 128                     # padded CLIP hidden
D_PAD      = 128                     # padded LM embedding dim
FF_PAD     = 128                     # 4*LM_DIM (already 128)
V_PAD      = 128                     # padded vocab
S_PAD      = 128                     # padded shared_emb_dim
HEAD_PAD   = 128                     # padded visual head output
B_PAD      = 8                       # padded batch rows (sublane multiple)
NEG_MASK   = -1e30                   # baked vocab-padding mask (f32 only)

LMOutput = namedtuple("LMOutput", ["logits", "hidden_states", "loss"])


def _ceil_to(x, m):
    return ((x + m - 1) // m) * m


def _zero_map(ndim):
    def idx(*_):          # (grid idx, *scalar-prefetch refs) -> block (0, ..., 0)
        return (0,) * ndim
    return idx


def _vspec(shape):
    """Whole-array VMEM block (toy shapes; see TODO about tiling for real shapes)."""
    return pl.BlockSpec(shape, _zero_map(len(shape)))


# ----------------------------------------------------------------------------
# Single fused kernel: vision stack -> LM input assembly -> residual MLP ->
# lm_head -> shifted CE loss (+ retrieval heads)
# ----------------------------------------------------------------------------
def _fused_kernel(retrieval, t_total, *refs):
    if retrieval:
        (lastrow_ref,                                            # scalar prefetch (SMEM)
         xp_ref, pw_ref, pb_ref, mw_ref, mb_ref, hw_ref, hb_ref,
         emb_ref, lab_ref, tgt_ref,
         w1_ref, b1_ref, w2_ref, b2_ref, lw_ref, lb_ref,
         tw_ref, tb_ref,
         hid_ref, logit_ref, loss_ref, vis_ref, lemb_ref) = refs
    else:
        (xp_ref, pw_ref, pb_ref, mw_ref, mb_ref, hw_ref, hb_ref,
         emb_ref, lab_ref, tgt_ref,
         w1_ref, b1_ref, w2_ref, b2_ref, lw_ref, lb_ref,
         hid_ref, logit_ref, loss_ref, vis_ref) = refs

    f32, bf16 = jnp.float32, jnp.bfloat16

    # ---------------- vision stack (stand-in for CLIP pooler_output) ----------------
    # patch-embedding "conv" as a matmul; bf16 operands, f32 accumulation
    h = jnp.dot(xp_ref[...], pw_ref[...], preferred_element_type=f32) + pb_ref[...]
    h = jnp.dot(h.astype(bf16), mw_ref[...], preferred_element_type=f32) + mb_ref[...]
    h = jax.nn.gelu(h, approximate=True)                       # (B*N_PATCHES, VIS_PAD)

    # mean-pool over patches as static sublane-slice sums (no f32 pool matmul)
    inv_np = 1.0 / N_PATCHES
    rows = [jnp.sum(h[b * N_PATCHES:(b + 1) * N_PATCHES, :], axis=0, keepdims=True)
            * inv_np for b in range(BATCH)]
    rows.append(jnp.zeros((B_PAD - BATCH, VIS_PAD), f32))
    pooled = jnp.concatenate(rows, axis=0)                      # (B_PAD, VIS_PAD)

    # layernorm over the real VIS_HIDDEN lanes: padded lanes are exactly zero, so
    # E[x^2]-mu^2 over the full 128 lanes / VIS_HIDDEN is exact (no iota mask needed)
    mu = jnp.sum(pooled, axis=-1, keepdims=True) * (1.0 / VIS_HIDDEN)
    ex2 = jnp.sum(pooled * pooled, axis=-1, keepdims=True) * (1.0 / VIS_HIDDEN)
    var = ex2 - mu * mu
    normed = (pooled - mu) * jax.lax.rsqrt(var + 1e-5)

    # visual_embeddings (captioning) or visual_fc (retrieval) head; pad lanes stay zero
    vis = jnp.dot(normed.astype(bf16), hw_ref[...], preferred_element_type=f32) \
        + hb_ref[...]                                           # (B_PAD, HEAD_PAD)

    if retrieval:
        ss = jnp.sum(vis * vis, axis=-1, keepdims=True)
        vis_ref[...] = (vis * jax.lax.rsqrt(ss + 1e-12))[0:BATCH, :]   # L2-normalized
    else:
        vis_ref[...] = vis[0:BATCH, :]                                  # raw head output

    # ---------------- LM input assembly (in-kernel embedding gather) ----------------
    lab = lab_ref[...]                                          # (M, 1) int32, -1 = none
    m_rows = lab.shape[0]
    lane_v = jax.lax.broadcasted_iota(jnp.int32, (m_rows, V_PAD), 1)
    onehot = (lane_v == lab).astype(bf16)                       # exact 0/1 rows
    x = jnp.dot(onehot, emb_ref[...], preferred_element_type=f32)       # (M, D_PAD)

    if not retrieval:
        # insert the visual prefix row at position 0 of every sequence (static rows)
        row_iota = jax.lax.broadcasted_iota(jnp.int32, (m_rows, 1), 0)
        for b in range(BATCH):
            vrow = jnp.broadcast_to(vis[b:b + 1, :], (m_rows, D_PAD))
            x = jnp.where(row_iota == b * t_total, vrow, x)

    # ---------------- residual MLP block (stand-in for the frozen LM) ----------------
    h1 = jnp.dot(x.astype(bf16), w1_ref[...], preferred_element_type=f32) + b1_ref[...]
    h1 = jax.nn.gelu(h1, approximate=True)
    h2 = jnp.dot(h1.astype(bf16), w2_ref[...], preferred_element_type=f32) \
        + b2_ref[...] + x
    hid_ref[...] = h2

    # ---------------- lm_head (vocab padding masked via -1e30 baked into bias) -------
    logits = jnp.dot(h2.astype(bf16), lw_ref[...], preferred_element_type=f32) \
        + lb_ref[...]
    logit_ref[...] = logits

    # ---------------- fused shifted causal-LM cross-entropy --------------------------
    tgt = tgt_ref[...]                                          # (M, 1) int32, <0 = ignore
    m = jnp.max(logits, axis=-1, keepdims=True)
    lse = jnp.log(jnp.sum(jnp.exp(logits - m), axis=-1, keepdims=True)) + m
    tgt_logit = jnp.sum(jnp.where(lane_v == tgt, logits, 0.0), axis=-1, keepdims=True)
    valid = (tgt >= 0).astype(f32)
    nll = valid * (lse - tgt_logit)                             # (M, 1)
    count = jnp.sum(valid, axis=0, keepdims=True)               # (1, 1)
    loss_ref[...] = jnp.sum(nll, axis=0, keepdims=True) / jnp.maximum(count, 1.0)

    if retrieval:
        # text_hidden_fcs[0] applied only to the selected last-token rows:
        # scalar-prefetched flat row indices + pl.ds dynamic row reads (no one-hot matmul)
        sel_rows = [hid_ref[pl.ds(lastrow_ref[b], 1), :] for b in range(BATCH)]
        sel_rows.append(jnp.zeros((B_PAD - BATCH, D_PAD), f32))
        sel = jnp.concatenate(sel_rows, axis=0)                 # (B_PAD, D_PAD)
        proj = jnp.dot(sel.astype(bf16), tw_ref[...], preferred_element_type=f32) \
            + tb_ref[...]
        ss2 = jnp.sum(proj * proj, axis=-1, keepdims=True)
        lemb_ref[...] = (proj * jax.lax.rsqrt(ss2 + 1e-12))[0:BATCH, :]


def fromage_fused_call(params, xp, lab_col, tgt_col, retrieval, t_total, m_pad,
                       last_rows=None):
    p = params
    ins = [xp, p["vis_patch_w"], p["vis_patch_b"], p["vis_mlp_w"], p["vis_mlp_b"]]
    if retrieval:
        ins += [p["visual_fc_w"], p["visual_fc_b"]]
    else:
        ins += [p["visual_embeddings_w"], p["visual_embeddings_b"]]
    ins += [p["emb_table"], lab_col, tgt_col,
            p["lm_fc1_w"], p["lm_fc1_b"], p["lm_fc2_w"], p["lm_fc2_b"],
            p["lm_head_w"], p["lm_head_b"]]
    if retrieval:
        ins += [p["text_hidden_fc_w"], p["text_hidden_fc_b"]]

    outs = [jax.ShapeDtypeStruct((m_pad, D_PAD), jnp.float32),   # hidden
            jax.ShapeDtypeStruct((m_pad, V_PAD), jnp.float32),   # logits
            jax.ShapeDtypeStruct((1, 1), jnp.float32),           # loss (scalar)
            jax.ShapeDtypeStruct((BATCH, HEAD_PAD), jnp.float32)]  # visual head out
    if retrieval:
        outs.append(jax.ShapeDtypeStruct((BATCH, S_PAD), jnp.float32))  # last_embedding

    grid_spec = pltpu.PrefetchScalarGridSpec(
        num_scalar_prefetch=1 if retrieval else 0,
        grid=(1,),
        in_specs=[_vspec(a.shape) for a in ins],
        out_specs=tuple(_vspec(o.shape) for o in outs),
    )
    call = pl.pallas_call(
        partial(_fused_kernel, retrieval, t_total),
        out_shape=tuple(outs),
        grid_spec=grid_spec,
        compiler_params=pltpu.CompilerParams(
            dimension_semantics=("arbitrary",),
            vmem_limit_bytes=32 * 1024 * 1024),
    )
    if retrieval:
        return call(last_rows, *ins)
    return call(*ins)


# ----------------------------------------------------------------------------
# Parameter initialization (deterministic, in-script, pre-padded, bf16 weights)
# ----------------------------------------------------------------------------
def init_params(key):
    ks = jax.random.split(key, 12)

    def lin(k, fan_in, fan_out):
        kw, kb = jax.random.split(k)
        lim = 1.0 / math.sqrt(fan_in)
        w = jax.random.uniform(kw, (fan_in, fan_out), jnp.float32, -lim, lim)
        b = jax.random.uniform(kb, (fan_out,), jnp.float32, -lim, lim)
        return w, b

    def pad_wb(w, b, kp, np_, b_dtype=jnp.bfloat16, b_pad_value=0.0):
        # zero-pad first, then cast: padded lanes stay exactly zero in bf16
        wp = jnp.pad(w, ((0, kp - w.shape[0]), (0, np_ - w.shape[1]))).astype(jnp.bfloat16)
        bp = jnp.pad(b, (0, np_ - b.shape[0]), constant_values=b_pad_value)
        bp = bp.reshape(1, np_).astype(b_dtype)
        return wp, bp

    p = {}
    w, b = lin(ks[0], PATCH_FEAT, VIS_HIDDEN)
    p["vis_patch_w"], p["vis_patch_b"] = pad_wb(w, b, K_PAD, VIS_PAD)
    w, b = lin(ks[1], VIS_HIDDEN, VIS_HIDDEN)
    p["vis_mlp_w"], p["vis_mlp_b"] = pad_wb(w, b, VIS_PAD, VIS_PAD)
    emb = 0.02 * jax.random.normal(ks[2], (VOCAB, LM_DIM), jnp.float32)
    p["emb_table"] = jnp.pad(emb, ((0, V_PAD - VOCAB),
                                   (0, D_PAD - LM_DIM))).astype(jnp.bfloat16)
    w, b = lin(ks[3], LM_DIM, 4 * LM_DIM)
    p["lm_fc1_w"], p["lm_fc1_b"] = pad_wb(w, b, D_PAD, FF_PAD)
    w, b = lin(ks[4], 4 * LM_DIM, LM_DIM)
    p["lm_fc2_w"], p["lm_fc2_b"] = pad_wb(w, b, FF_PAD, D_PAD)
    w, b = lin(ks[5], LM_DIM, VOCAB)
    # lm_head bias stays f32 with -1e30 in the padded vocab lanes (baked vocab mask)
    p["lm_head_w"], p["lm_head_b"] = pad_wb(w, b, D_PAD, V_PAD,
                                            b_dtype=jnp.float32, b_pad_value=NEG_MASK)
    w, b = lin(ks[6], VIS_HIDDEN, LM_DIM * N_VIS_TOKENS)
    p["visual_embeddings_w"], p["visual_embeddings_b"] = pad_wb(w, b, VIS_PAD, HEAD_PAD)
    w, b = lin(ks[7], VIS_HIDDEN, SHARED_DIM)
    p["visual_fc_w"], p["visual_fc_b"] = pad_wb(w, b, VIS_PAD, HEAD_PAD)
    w, b = lin(ks[8], LM_DIM, SHARED_DIM)
    p["text_hidden_fc_w"], p["text_hidden_fc_b"] = pad_wb(w, b, D_PAD, S_PAD)
    p["logit_scale"] = jnp.array(LOGIT_SCALE, jnp.float32)
    return p


# ----------------------------------------------------------------------------
# FromageModel forward (mode is static; whole function is jitted)
# ----------------------------------------------------------------------------
def _mask_after_first_stop(labels, stop_values):
    """label[k:] = -100 starting at first position whose token is in stop_values."""
    is_stop = jnp.zeros(labels.shape, bool)
    for v in stop_values:
        is_stop |= (labels == v)
    has_stop = jnp.any(is_stop, axis=1)
    first = jnp.where(has_stop, jnp.argmax(is_stop, axis=1), labels.shape[1])
    pos = jnp.arange(labels.shape[1])[None, :]
    return jnp.where(pos >= first[:, None], -100, labels)


def fromage_forward(params, pixel_values, labels, caption_len, mode="captioning"):
    if mode not in ("captioning", "retrieval"):
        raise ValueError(mode)
    retrieval = (mode == "retrieval")
    B, T = labels.shape
    last_embedding_idx = caption_len - 1

    if retrieval:
        t_total = T
        full_labels = _mask_after_first_stop(labels, (PAD_TOKEN_ID,))
        lm_labels = labels
    else:
        t_total = T + N_VIS_TOKENS
        last_embedding_idx = last_embedding_idx + N_VIS_TOKENS
        vis_lab = jnp.full((B, N_VIS_TOKENS), -100, labels.dtype)
        full_labels = jnp.concatenate([vis_lab, labels], axis=1)
        full_labels = _mask_after_first_stop(full_labels, (PAD_TOKEN_ID, RET_TOKEN_IDX))
        # visual prefix rows carry sentinel -1 -> zero token embedding (replaced in-kernel)
        lm_labels = jnp.concatenate(
            [jnp.full((B, N_VIS_TOKENS), -1, labels.dtype), labels], axis=1)

    m_rows = B * t_total
    m_pad = _ceil_to(m_rows, 8)

    # int32 label / shifted-target columns (tiny, replaces the dense one-hot CE matrix)
    lab_col = jnp.pad(lm_labels.reshape(m_rows), (0, m_pad - m_rows),
                      constant_values=-1).reshape(m_pad, 1).astype(jnp.int32)
    tgt = jnp.pad(full_labels[:, 1:], ((0, 0), (0, 1)), constant_values=-100)
    tgt_col = jnp.pad(tgt.reshape(m_rows), (0, m_pad - m_rows),
                      constant_values=-100).reshape(m_pad, 1).astype(jnp.int32)

    # NCHW -> flattened non-overlapping patches, padded lane-dense, pre-cast to bf16
    m_vis = B * N_PATCHES
    m_vis_pad = _ceil_to(m_vis, 8)
    xp = pixel_values.reshape(B, IMG_C, IMG_HW // PATCH, PATCH, IMG_HW // PATCH, PATCH)
    xp = jnp.transpose(xp, (0, 2, 4, 1, 3, 5)).reshape(m_vis, PATCH_FEAT)
    xp = jnp.pad(xp, ((0, m_vis_pad - m_vis), (0, K_PAD - PATCH_FEAT))).astype(jnp.bfloat16)

    last_rows = None
    if retrieval:
        last_rows = (jnp.arange(B) * t_total + last_embedding_idx).astype(jnp.int32)

    res = fromage_fused_call(params, xp, lab_col, tgt_col, retrieval, t_total, m_pad,
                             last_rows)
    hid_pad, logit_pad, loss11, vis_out = res[0], res[1], res[2], res[3]

    hidden = hid_pad[:m_rows, :LM_DIM].reshape(B, t_total, LM_DIM)
    logits = logit_pad[:m_rows, :VOCAB].reshape(B, t_total, VOCAB)
    loss = loss11[0, 0]

    # inputs_embeds for hidden_states[0] (output-only bookkeeping, matches kernel values)
    tok_embs = jnp.take(params["emb_table"], labels, axis=0).astype(jnp.float32)[..., :LM_DIM]
    if retrieval:
        inputs_embeds = tok_embs
    else:
        vis_prefix = vis_out[:, :LM_DIM * N_VIS_TOKENS].reshape(B, N_VIS_TOKENS, LM_DIM)
        inputs_embeds = jnp.concatenate([vis_prefix, tok_embs], axis=1)

    output = LMOutput(logits=logits, hidden_states=(inputs_embeds, hidden), loss=loss)

    if retrieval:
        last_embedding = res[4][:, :SHARED_DIM]                  # already L2-normalized
        visual_embs = jnp.exp(params["logit_scale"]) * vis_out[:, :SHARED_DIM]
        # PyTorch-style negative-index wrap for caption_len == 1
        prev_idx = jnp.mod(last_embedding_idx - 1, t_total)
        last_output_logit = jnp.take_along_axis(
            logits, prev_idx[:, None, None], axis=1)[:, 0, :]
        return output, full_labels, last_embedding, last_output_logit, visual_embs
    else:
        visual_embs = vis_out[:, :LM_DIM * N_VIS_TOKENS].reshape(B, N_VIS_TOKENS, LM_DIM)
        return output, full_labels, None, None, visual_embs


# ----------------------------------------------------------------------------
# Main
# ----------------------------------------------------------------------------
if __name__ == "__main__":
    key = jax.random.PRNGKey(0)
    kp, kpix, klab = jax.random.split(key, 3)
    params = init_params(kp)

    pixel_values = jax.random.normal(kpix, (BATCH, IMG_C, IMG_HW, IMG_HW), jnp.float32)
    caption_len = jnp.array([5, 7], jnp.int32)
    # tokens in [2, VOCAB) for real words, PAD after caption_len
    raw = jax.random.randint(klab, (BATCH, SEQ), 2, VOCAB, jnp.int32)
    pos = jnp.arange(SEQ)[None, :]
    labels = jnp.where(pos < caption_len[:, None], raw, PAD_TOKEN_ID)

    fwd = jax.jit(fromage_forward, static_argnames=("mode",))

    # retrieval mode (exercises all Fromage-specific heads)
    out_r = fwd(params, pixel_values, labels, caption_len, mode="retrieval")
    # captioning mode
    out_c = fwd(params, pixel_values, labels, caption_len, mode="captioning")

    jax.block_until_ready(out_r[0].logits)
    jax.block_until_ready(out_r[2])
    jax.block_until_ready(out_r[4])
    jax.block_until_ready(out_c[0].logits)

    # light sanity checks
    assert out_r[2].shape == (BATCH, SHARED_DIM)          # last_embedding
    assert out_r[3].shape == (BATCH, VOCAB)               # last_output_logit
    assert out_r[4].shape == (BATCH, SHARED_DIM)          # scaled visual_embs
    assert out_c[4].shape == (BATCH, N_VIS_TOKENS, LM_DIM)
    assert bool(jnp.isfinite(out_r[0].loss)) and bool(jnp.isfinite(out_c[0].loss))
    print("KERNEL_OK")
</pallas_src>

<mosaic_0001>
module attributes {stable_mosaic.version = 11 : i64} {
  func.func @_fused_kernel(%arg0: i32, %arg1: memref<2xi32, #tpu.memory_space<smem>>, %arg2: memref<8x256xbf16, #tpu.memory_space<vmem>>, %arg3: memref<256x128xbf16, #tpu.memory_space<vmem>>, %arg4: memref<1x128xbf16, #tpu.memory_space<vmem>>, %arg5: memref<128x128xbf16, #tpu.memory_space<vmem>>, %arg6: memref<1x128xbf16, #tpu.memory_space<vmem>>, %arg7: memref<128x128xbf16, #tpu.memory_space<vmem>>, %arg8: memref<1x128xbf16, #tpu.memory_space<vmem>>, %arg9: memref<128x128xbf16, #tpu.memory_space<vmem>>, %arg10: memref<16x1xi32, #tpu.memory_space<vmem>>, %arg11: memref<16x1xi32, #tpu.memory_space<vmem>>, %arg12: memref<128x128xbf16, #tpu.memory_space<vmem>>, %arg13: memref<1x128xbf16, #tpu.memory_space<vmem>>, %arg14: memref<128x128xbf16, #tpu.memory_space<vmem>>, %arg15: memref<1x128xbf16, #tpu.memory_space<vmem>>, %arg16: memref<128x128xbf16, #tpu.memory_space<vmem>>, %arg17: memref<1x128xf32, #tpu.memory_space<vmem>>, %arg18: memref<128x128xbf16, #tpu.memory_space<vmem>>, %arg19: memref<1x128xbf16, #tpu.memory_space<vmem>>, %arg20: memref<16x128xf32, #tpu.memory_space<vmem>>, %arg21: memref<16x128xf32, #tpu.memory_space<vmem>>, %arg22: memref<1x1xf32, #tpu.memory_space<vmem>>, %arg23: memref<2x128xf32, #tpu.memory_space<vmem>>, %arg24: memref<2x128xf32, #tpu.memory_space<vmem>>) attributes {dimension_semantics = [#tpu.dimension_semantics<arbitrary>], iteration_bounds = array<i64: 1>, scalar_prefetch = 1 : i64, scratch_operands = 0 : i64, tpu.core_type = #tpu.core_type<tc>, window_params = [{pipeline_mode = #tpu.pipeline_mode<synchronous>, transform_indices = @transform_0, window_bounds = array<i64: 8, 256>}, {pipeline_mode = #tpu.pipeline_mode<synchronous>, transform_indices = @transform_1, window_bounds = array<i64: 256, 128>}, {pipeline_mode = #tpu.pipeline_mode<synchronous>, transform_indices = @transform_2, window_bounds = array<i64: 1, 128>}, {pipeline_mode = #tpu.pipeline_mode<synchronous>, transform_indices = @transform_3, window_bounds = array<i64: 128, 128>}, {pipeline_mode = #tpu.pipeline_mode<synchronous>, transform_indices = @transform_4, window_bounds = array<i64: 1, 128>}, {pipeline_mode = #tpu.pipeline_mode<synchronous>, transform_indices = @transform_5, window_bounds = array<i64: 128, 128>}, {pipeline_mode = #tpu.pipeline_mode<synchronous>, transform_indices = @transform_6, window_bounds = array<i64: 1, 128>}, {pipeline_mode = #tpu.pipeline_mode<synchronous>, transform_indices = @transform_7, window_bounds = array<i64: 128, 128>}, {pipeline_mode = #tpu.pipeline_mode<synchronous>, transform_indices = @transform_8, window_bounds = array<i64: 16, 1>}, {pipeline_mode = #tpu.pipeline_mode<synchronous>, transform_indices = @transform_9, window_bounds = array<i64: 16, 1>}, {pipeline_mode = #tpu.pipeline_mode<synchronous>, transform_indices = @transform_10, window_bounds = array<i64: 128, 128>}, {pipeline_mode = #tpu.pipeline_mode<synchronous>, transform_indices = @transform_11, window_bounds = array<i64: 1, 128>}, {pipeline_mode = #tpu.pipeline_mode<synchronous>, transform_indices = @transform_12, window_bounds = array<i64: 128, 128>}, {pipeline_mode = #tpu.pipeline_mode<synchronous>, transform_indices = @transform_13, window_bounds = array<i64: 1, 128>}, {pipeline_mode = #tpu.pipeline_mode<synchronous>, transform_indices = @transform_14, window_bounds = array<i64: 128, 128>}, {pipeline_mode = #tpu.pipeline_mode<synchronous>, transform_indices = @transform_15, window_bounds = array<i64: 1, 128>}, {pipeline_mode = #tpu.pipeline_mode<synchronous>, transform_indices = @transform_16, window_bounds = array<i64: 128, 128>}, {pipeline_mode = #tpu.pipeline_mode<synchronous>, transform_indices = @transform_17, window_bounds = array<i64: 1, 128>}, {pipeline_mode = #tpu.pipeline_mode<synchronous>, transform_indices = @transform_18, window_bounds = array<i64: 16, 128>}, {pipeline_mode = #tpu.pipeline_mode<synchronous>, transform_indices = @transform_19, window_bounds = array<i64: 16, 128>}, {pipeline_mode = #tpu.pipeline_mode<synchronous>, transform_indices = @transform_20, window_bounds = array<i64: 1, 1>}, {pipeline_mode = #tpu.pipeline_mode<synchronous>, transform_indices = @transform_21, window_bounds = array<i64: 2, 128>}, {pipeline_mode = #tpu.pipeline_mode<synchronous>, transform_indices = @transform_22, window_bounds = array<i64: 2, 128>}]} {
    %c0 = arith.constant 0 : index
    %c0_0 = arith.constant 0 : index
    %0 = vector.load %arg2[%c0, %c0_0] : memref<8x256xbf16, #tpu.memory_space<vmem>>, vector<8x256xbf16>
    %c0_1 = arith.constant 0 : index
    %c0_2 = arith.constant 0 : index
    %1 = vector.load %arg3[%c0_1, %c0_2] : memref<256x128xbf16, #tpu.memory_space<vmem>>, vector<256x128xbf16>
    %cst = arith.constant dense<0.000000e+00> : vector<8x128xf32>
    %2 = tpu.matmul %0, %1, %cst {dimension_numbers = #tpu.dot_dimension_numbers<[1], [0], [0], [1], [0, 0, 1, 1], [], []>} : vector<8x256xbf16>, vector<256x128xbf16>, vector<8x128xf32> -> vector<8x128xf32>
    %c0_3 = arith.constant 0 : index
    %c0_4 = arith.constant 0 : index
    %3 = vector.load %arg4[%c0_3, %c0_4] : memref<1x128xbf16, #tpu.memory_space<vmem>>, vector<1x128xbf16>
    %4 = arith.extf %3 : vector<1x128xbf16> to vector<1x128xf32>
    %5 = vector.broadcast %4 : vector<1x128xf32> to vector<8x128xf32>
    %6 = arith.addf %2, %5 : vector<8x128xf32>
    %7 = arith.truncf %6 : vector<8x128xf32> to vector<8x128xbf16>
    %c0_5 = arith.constant 0 : index
    %c0_6 = arith.constant 0 : index
    %8 = vector.load %arg5[%c0_5, %c0_6] : memref<128x128xbf16, #tpu.memory_space<vmem>>, vector<128x128xbf16>
    %cst_7 = arith.constant dense<0.000000e+00> : vector<8x128xf32>
    %9 = tpu.matmul %7, %8, %cst_7 {dimension_numbers = #tpu.dot_dimension_numbers<[1], [0], [0], [1], [0, 0, 1, 1], [], []>} : vector<8x128xbf16>, vector<128x128xbf16>, vector<8x128xf32> -> vector<8x128xf32>
    %c0_8 = arith.constant 0 : index
    %c0_9 = arith.constant 0 : index
    %10 = vector.load %arg6[%c0_8, %c0_9] : memref<1x128xbf16, #tpu.memory_space<vmem>>, vector<1x128xbf16>
    %11 = arith.extf %10 : vector<1x128xbf16> to vector<1x128xf32>
    %12 = vector.broadcast %11 : vector<1x128xf32> to vector<8x128xf32>
    %13 = arith.addf %9, %12 : vector<8x128xf32>
    %14 = arith.mulf %13, %13 : vector<8x128xf32>
    %15 = arith.mulf %13, %14 : vector<8x128xf32>
    %cst_10 = arith.constant 4.471500e-02 : f32
    %16 = vector.broadcast %cst_10 : f32 to vector<8x128xf32>
    %17 = arith.mulf %16, %15 : vector<8x128xf32>
    %18 = arith.addf %13, %17 : vector<8x128xf32>
    %cst_11 = arith.constant 0.797884583 : f32
    %19 = vector.broadcast %cst_11 : f32 to vector<8x128xf32>
    %20 = arith.mulf %19, %18 : vector<8x128xf32>
    %21 = math.tanh %20 : vector<8x128xf32>
    %cst_12 = arith.constant 1.000000e+00 : f32
    %22 = vector.broadcast %cst_12 : f32 to vector<8x128xf32>
    %23 = arith.addf %22, %21 : vector<8x128xf32>
    %cst_13 = arith.constant 5.000000e-01 : f32
    %24 = vector.broadcast %cst_13 : f32 to vector<8x128xf32>
    %25 = arith.mulf %24, %23 : vector<8x128xf32>
    %26 = arith.mulf %13, %25 : vector<8x128xf32>
    %27 = vector.extract_strided_slice %26 {offsets = [0, 0], sizes = [4, 128], strides = [1, 1]} : vector<8x128xf32> to vector<4x128xf32>
    %cst_14 = arith.constant dense<0.000000e+00> : vector<128xf32>
    %28 = vector.multi_reduction <add>, %27, %cst_14 [0] : vector<4x128xf32> to vector<128xf32>
    %29 = vector.shape_cast %28 : vector<128xf32> to vector<1x128xf32>
    %cst_15 = arith.constant 2.500000e-01 : f32
    %30 = vector.broadcast %cst_15 : f32 to vector<1x128xf32>
    %31 = arith.mulf %29, %30 : vector<1x128xf32>
    %32 = vector.extract_strided_slice %26 {offsets = [4, 0], sizes = [4, 128], strides = [1, 1]} : vector<8x128xf32> to vector<4x128xf32>
    %cst_16 = arith.constant dense<0.000000e+00> : vector<128xf32>
    %33 = vector.multi_reduction <add>, %32, %cst_16 [0] : vector<4x128xf32> to vector<128xf32>
    %34 = vector.shape_cast %33 : vector<128xf32> to vector<1x128xf32>
    %cst_17 = arith.constant 2.500000e-01 : f32
    %35 = vector.broadcast %cst_17 : f32 to vector<1x128xf32>
    %36 = arith.mulf %34, %35 : vector<1x128xf32>
    %cst_18 = arith.constant 0.000000e+00 : f32
    %37 = vector.broadcast %cst_18 : f32 to vector<6x128xf32>
    %38 = tpu.concatenate %31, %36, %37 in 0 : vector<1x128xf32>, vector<1x128xf32>, vector<6x128xf32> -> vector<8x128xf32>
    %cst_19 = arith.constant dense<0.000000e+00> : vector<8xf32>
    %39 = vector.multi_reduction <add>, %38, %cst_19 [1] : vector<8x128xf32> to vector<8xf32>
    %40 = vector.shape_cast %39 : vector<8xf32> to vector<8x1xf32>
    %cst_20 = arith.constant 3.125000e-02 : f32
    %41 = vector.broadcast %cst_20 : f32 to vector<8x1xf32>
    %42 = arith.mulf %40, %41 : vector<8x1xf32>
    %43 = arith.mulf %38, %38 : vector<8x128xf32>
    %cst_21 = arith.constant dense<0.000000e+00> : vector<8xf32>
    %44 = vector.multi_reduction <add>, %43, %cst_21 [1] : vector<8x128xf32> to vector<8xf32>
    %45 = vector.shape_cast %44 : vector<8xf32> to vector<8x1xf32>
    %cst_22 = arith.constant 3.125000e-02 : f32
    %46 = vector.broadcast %cst_22 : f32 to vector<8x1xf32>
    %47 = arith.mulf %45, %46 : vector<8x1xf32>
    %48 = arith.mulf %42, %42 : vector<8x1xf32>
    %49 = arith.subf %47, %48 : vector<8x1xf32>
    %50 = vector.broadcast %42 : vector<8x1xf32> to vector<8x128xf32>
    %51 = arith.subf %38, %50 : vector<8x128xf32>
    %cst_23 = arith.constant 9.99999974E-6 : f32
    %52 = vector.broadcast %cst_23 : f32 to vector<8x1xf32>
    %53 = arith.addf %49, %52 : vector<8x1xf32>
    %54 = math.rsqrt %53 : vector<8x1xf32>
    %55 = vector.broadcast %54 : vector<8x1xf32> to vector<8x128xf32>
    %56 = arith.mulf %51, %55 : vector<8x128xf32>
    %57 = arith.truncf %56 : vector<8x128xf32> to vector<8x128xbf16>
    %c0_24 = arith.constant 0 : index
    %c0_25 = arith.constant 0 : index
    %58 = vector.load %arg7[%c0_24, %c0_25] : memref<128x128xbf16, #tpu.memory_space<vmem>>, vector<128x128xbf16>
    %cst_26 = arith.constant dense<0.000000e+00> : vector<8x128xf32>
    %59 = tpu.matmul %57, %58, %cst_26 {dimension_numbers = #tpu.dot_dimension_numbers<[1], [0], [0], [1], [0, 0, 1, 1], [], []>} : vector<8x128xbf16>, vector<128x128xbf16>, vector<8x128xf32> -> vector<8x128xf32>
    %c0_27 = arith.constant 0 : index
    %c0_28 = arith.constant 0 : index
    %60 = vector.load %arg8[%c0_27, %c0_28] : memref<1x128xbf16, #tpu.memory_space<vmem>>, vector<1x128xbf16>
    %61 = arith.extf %60 : vector<1x128xbf16> to vector<1x128xf32>
    %62 = vector.broadcast %61 : vector<1x128xf32> to vector<8x128xf32>
    %63 = arith.addf %59, %62 : vector<8x128xf32>
    %64 = arith.mulf %63, %63 : vector<8x128xf32>
    %cst_29 = arith.constant dense<0.000000e+00> : vector<8xf32>
    %65 = vector.multi_reduction <add>, %64, %cst_29 [1] : vector<8x128xf32> to vector<8xf32>
    %66 = vector.shape_cast %65 : vector<8xf32> to vector<8x1xf32>
    %cst_30 = arith.constant 9.99999996E-13 : f32
    %67 = vector.broadcast %cst_30 : f32 to vector<8x1xf32>
    %68 = arith.addf %66, %67 : vector<8x1xf32>
    %69 = math.rsqrt %68 : vector<8x1xf32>
    %70 = vector.broadcast %69 : vector<8x1xf32> to vector<8x128xf32>
    %71 = arith.mulf %63, %70 : vector<8x128xf32>
    %72 = vector.extract_strided_slice %71 {offsets = [0, 0], sizes = [2, 128], strides = [1, 1]} : vector<8x128xf32> to vector<2x128xf32>
    %c0_31 = arith.constant 0 : index
    %c0_32 = arith.constant 0 : index
    %73 = vector.load %arg23[%c0_31, %c0_32] : memref<2x128xf32, #tpu.memory_space<vmem>>, vector<2x128xf32>
    tpu.vector_store %arg23[%c0_31, %c0_32], %72 {strides = array<i32>} : memref<2x128xf32, #tpu.memory_space<vmem>>, vector<2x128xf32>,
    %c0_33 = arith.constant 0 : index
    %c0_34 = arith.constant 0 : index
    %74 = vector.load %arg10[%c0_33, %c0_34] : memref<16x1xi32, #tpu.memory_space<vmem>>, vector<16x1xi32>
    %75 = tpu.iota {dimensions = array<i32: 1>} : vector<16x128xi32>
    %76 = vector.broadcast %74 : vector<16x1xi32> to vector<16x128xi32>
    %77 = arith.cmpi eq, %75, %76 : vector<16x128xi32>
    %78 = arith.extui %77 : vector<16x128xi1> to vector<16x128xi32>
    %79 = arith.sitofp %78 : vector<16x128xi32> to vector<16x128xf32>
    %80 = arith.truncf %79 : vector<16x128xf32> to vector<16x128xbf16>
    %c0_35 = arith.constant 0 : index
    %c0_36 = arith.constant 0 : index
    %81 = vector.load %arg9[%c0_35, %c0_36] : memref<128x128xbf16, #tpu.memory_space<vmem>>, vector<128x128xbf16>
    %cst_37 = arith.constant dense<0.000000e+00> : vector<16x128xf32>
    %82 = tpu.matmul %80, %81, %cst_37 {dimension_numbers = #tpu.dot_dimension_numbers<[1], [0], [0], [1], [0, 0, 1, 1], [], []>} : vector<16x128xbf16>, vector<128x128xbf16>, vector<16x128xf32> -> vector<16x128xf32>
    %83 = arith.truncf %82 : vector<16x128xf32> to vector<16x128xbf16>
    %c0_38 = arith.constant 0 : index
    %c0_39 = arith.constant 0 : index
    %84 = vector.load %arg12[%c0_38, %c0_39] : memref<128x128xbf16, #tpu.memory_space<vmem>>, vector<128x128xbf16>
    %cst_40 = arith.constant dense<0.000000e+00> : vector<16x128xf32>
    %85 = tpu.matmul %83, %84, %cst_40 {dimension_numbers = #tpu.dot_dimension_numbers<[1], [0], [0], [1], [0, 0, 1, 1], [], []>} : vector<16x128xbf16>, vector<128x128xbf16>, vector<16x128xf32> -> vector<16x128xf32>
    %c0_41 = arith.constant 0 : index
    %c0_42 = arith.constant 0 : index
    %86 = vector.load %arg13[%c0_41, %c0_42] : memref<1x128xbf16, #tpu.memory_space<vmem>>, vector<1x128xbf16>
    %87 = arith.extf %86 : vector<1x128xbf16> to vector<1x128xf32>
    %88 = vector.broadcast %87 : vector<1x128xf32> to vector<16x128xf32>
    %89 = arith.addf %85, %88 : vector<16x128xf32>
    %90 = arith.mulf %89, %89 : vector<16x128xf32>
    %91 = arith.mulf %89, %90 : vector<16x128xf32>
    %cst_43 = arith.constant 4.471500e-02 : f32
    %92 = vector.broadcast %cst_43 : f32 to vector<16x128xf32>
    %93 = arith.mulf %92, %91 : vector<16x128xf32>
    %94 = arith.addf %89, %93 : vector<16x128xf32>
    %cst_44 = arith.constant 0.797884583 : f32
    %95 = vector.broadcast %cst_44 : f32 to vector<16x128xf32>
    %96 = arith.mulf %95, %94 : vector<16x128xf32>
    %97 = math.tanh %96 : vector<16x128xf32>
    %cst_45 = arith.constant 1.000000e+00 : f32
    %98 = vector.broadcast %cst_45 : f32 to vector<16x128xf32>
    %99 = arith.addf %98, %97 : vector<16x128xf32>
    %cst_46 = arith.constant 5.000000e-01 : f32
    %100 = vector.broadcast %cst_46 : f32 to vector<16x128xf32>
    %101 = arith.mulf %100, %99 : vector<16x128xf32>
    %102 = arith.mulf %89, %101 : vector<16x128xf32>
    %103 = arith.truncf %102 : vector<16x128xf32> to vector<16x128xbf16>
    %c0_47 = arith.constant 0 : index
    %c0_48 = arith.constant 0 : index
    %104 = vector.load %arg14[%c0_47, %c0_48] : memref<128x128xbf16, #tpu.memory_space<vmem>>, vector<128x128xbf16>
    %cst_49 = arith.constant dense<0.000000e+00> : vector<16x128xf32>
    %105 = tpu.matmul %103, %104, %cst_49 {dimension_numbers = #tpu.dot_dimension_numbers<[1], [0], [0], [1], [0, 0, 1, 1], [], []>} : vector<16x128xbf16>, vector<128x128xbf16>, vector<16x128xf32> -> vector<16x128xf32>
    %c0_50 = arith.constant 0 : index
    %c0_51 = arith.constant 0 : index
    %106 = vector.load %arg15[%c0_50, %c0_51] : memref<1x128xbf16, #tpu.memory_space<vmem>>, vector<1x128xbf16>
    %107 = arith.extf %106 : vector<1x128xbf16> to vector<1x128xf32>
    %108 = vector.broadcast %107 : vector<1x128xf32> to vector<16x128xf32>
    %109 = arith.addf %105, %108 : vector<16x128xf32>
    %110 = arith.addf %109, %82 : vector<16x128xf32>
    %c0_52 = arith.constant 0 : index
    %c0_53 = arith.constant 0 : index
    %111 = vector.load %arg20[%c0_52, %c0_53] : memref<16x128xf32, #tpu.memory_space<vmem>>, vector<16x128xf32>
    tpu.vector_store %arg20[%c0_52, %c0_53], %110 {strides = array<i32>} : memref<16x128xf32, #tpu.memory_space<vmem>>, vector<16x128xf32>,
    %112 = arith.truncf %110 : vector<16x128xf32> to vector<16x128xbf16>
    %c0_54 = arith.constant 0 : index
    %c0_55 = arith.constant 0 : index
    %113 = vector.load %arg16[%c0_54, %c0_55] : memref<128x128xbf16, #tpu.memory_space<vmem>>, vector<128x128xbf16>
    %cst_56 = arith.constant dense<0.000000e+00> : vector<16x128xf32>
    %114 = tpu.matmul %112, %113, %cst_56 {dimension_numbers = #tpu.dot_dimension_numbers<[1], [0], [0], [1], [0, 0, 1, 1], [], []>} : vector<16x128xbf16>, vector<128x128xbf16>, vector<16x128xf32> -> vector<16x128xf32>
    %c0_57 = arith.constant 0 : index
    %c0_58 = arith.constant 0 : index
    %115 = vector.load %arg17[%c0_57, %c0_58] : memref<1x128xf32, #tpu.memory_space<vmem>>, vector<1x128xf32>
    %116 = vector.broadcast %115 : vector<1x128xf32> to vector<16x128xf32>
    %117 = arith.addf %114, %116 : vector<16x128xf32>
    %c0_59 = arith.constant 0 : index
    %c0_60 = arith.constant 0 : index
    %118 = vector.load %arg21[%c0_59, %c0_60] : memref<16x128xf32, #tpu.memory_space<vmem>>, vector<16x128xf32>
    tpu.vector_store %arg21[%c0_59, %c0_60], %117 {strides = array<i32>} : memref<16x128xf32, #tpu.memory_space<vmem>>, vector<16x128xf32>,
    %c0_61 = arith.constant 0 : index
    %c0_62 = arith.constant 0 : index
    %119 = vector.load %arg11[%c0_61, %c0_62] : memref<16x1xi32, #tpu.memory_space<vmem>>, vector<16x1xi32>
    %cst_63 = arith.constant dense<0xFF800000> : vector<16xf32>
    %120 = vector.multi_reduction <maximumf>, %117, %cst_63 [1] : vector<16x128xf32> to vector<16xf32>
    %121 = vector.shape_cast %120 : vector<16xf32> to vector<16x1xf32>
    %122 = vector.broadcast %121 : vector<16x1xf32> to vector<16x128xf32>
    %123 = arith.subf %117, %122 : vector<16x128xf32>
    %124 = math.exp %123 : vector<16x128xf32>
    %cst_64 = arith.constant dense<0.000000e+00> : vector<16xf32>
    %125 = vector.multi_reduction <add>, %124, %cst_64 [1] : vector<16x128xf32> to vector<16xf32>
    %126 = vector.shape_cast %125 : vector<16xf32> to vector<16x1xf32>
    %127 = math.log %126 : vector<16x1xf32>
    %128 = arith.addf %127, %121 : vector<16x1xf32>
    %129 = vector.broadcast %119 : vector<16x1xi32> to vector<16x128xi32>
    %130 = arith.cmpi eq, %75, %129 : vector<16x128xi32>
    %cst_65 = arith.constant 0.000000e+00 : f32
    %131 = vector.broadcast %cst_65 : f32 to vector<16x128xf32>
    %132 = arith.select %130, %117, %131 : vector<16x128xi1>, vector<16x128xf32>
    %cst_66 = arith.constant dense<0.000000e+00> : vector<16xf32>
    %133 = vector.multi_reduction <add>, %132, %cst_66 [1] : vector<16x128xf32> to vector<16xf32>
    %134 = vector.shape_cast %133 : vector<16xf32> to vector<16x1xf32>
    %c0_i32 = arith.constant 0 : i32
    %135 = vector.broadcast %c0_i32 : i32 to vector<16x1xi32>
    %136 = arith.cmpi sge, %119, %135 : vector<16x1xi32>
    %137 = arith.extui %136 : vector<16x1xi1> to vector<16x1xi32>
    %138 = arith.sitofp %137 : vector<16x1xi32> to vector<16x1xf32>
    %139 = arith.subf %128, %134 : vector<16x1xf32>
    %140 = arith.mulf %138, %139 : vector<16x1xf32>
    %cst_67 = arith.constant dense<0.000000e+00> : vector<1xf32>
    %141 = vector.multi_reduction <add>, %138, %cst_67 [0] : vector<16x1xf32> to vector<1xf32>
    %142 = vector.shape_cast %141 : vector<1xf32> to vector<1x1xf32>
    %cst_68 = arith.constant dense<0.000000e+00> : vector<1xf32>
    %143 = vector.multi_reduction <add>, %140, %cst_68 [0] : vector<16x1xf32> to vector<1xf32>
    %144 = vector.shape_cast %143 : vector<1xf32> to vector<1x1xf32>
    %cst_69 = arith.constant 1.000000e+00 : f32
    %145 = vector.broadcast %cst_69 : f32 to vector<1x1xf32>
    %146 = arith.maximumf %142, %145 : vector<1x1xf32>
    %147 = arith.divf %144, %146 : vector<1x1xf32>
    %c0_70 = arith.constant 0 : index
    %c0_71 = arith.constant 0 : index
    %148 = vector.load %arg22[%c0_70, %c0_71] : memref<1x1xf32, #tpu.memory_space<vmem>>, vector<1x1xf32>
    tpu.vector_store %arg22[%c0_70, %c0_71], %147 {strides = array<i32>} : memref<1x1xf32, #tpu.memory_space<vmem>>, vector<1x1xf32>,
    %c0_72 = arith.constant 0 : index
    %149 = memref.load %arg1[%c0_72] : memref<2xi32, #tpu.memory_space<smem>>
    %150 = arith.index_cast %149 : i32 to index
    %c0_73 = arith.constant 0 : index
    %151 = vector.load %arg20[%150, %c0_73] : memref<16x128xf32, #tpu.memory_space<vmem>>, vector<1x128xf32>
    %c1 = arith.constant 1 : index
    %152 = memref.load %arg1[%c1] : memref<2xi32, #tpu.memory_space<smem>>
    %153 = arith.index_cast %152 : i32 to index
    %c0_74 = arith.constant 0 : index
    %154 = vector.load %arg20[%153, %c0_74] : memref<16x128xf32, #tpu.memory_space<vmem>>, vector<1x128xf32>
    %cst_75 = arith.constant 0.000000e+00 : f32
    %155 = vector.broadcast %cst_75 : f32 to vector<6x128xf32>
    %156 = tpu.concatenate %151, %154, %155 in 0 : vector<1x128xf32>, vector<1x128xf32>, vector<6x128xf32> -> vector<8x128xf32>
    %157 = arith.truncf %156 : vector<8x128xf32> to vector<8x128xbf16>
    %c0_76 = arith.constant 0 : index
    %c0_77 = arith.constant 0 : index
    %158 = vector.load %arg18[%c0_76, %c0_77] : memref<128x128xbf16, #tpu.memory_space<vmem>>, vector<128x128xbf16>
    %cst_78 = arith.constant dense<0.000000e+00> : vector<8x128xf32>
    %159 = tpu.matmul %157, %158, %cst_78 {dimension_numbers = #tpu.dot_dimension_numbers<[1], [0], [0], [1], [0, 0, 1, 1], [], []>} : vector<8x128xbf16>, vector<128x128xbf16>, vector<8x128xf32> -> vector<8x128xf32>
    %c0_79 = arith.constant 0 : index
    %c0_80 = arith.constant 0 : index
    %160 = vector.load %arg19[%c0_79, %c0_80] : memref<1x128xbf16, #tpu.memory_space<vmem>>, vector<1x128xbf16>
    %161 = arith.extf %160 : vector<1x128xbf16> to vector<1x128xf32>
    %162 = vector.broadcast %161 : vector<1x128xf32> to vector<8x128xf32>
    %163 = arith.addf %159, %162 : vector<8x128xf32>
    %164 = arith.mulf %163, %163 : vector<8x128xf32>
    %cst_81 = arith.constant dense<0.000000e+00> : vector<8xf32>
    %165 = vector.multi_reduction <add>, %164, %cst_81 [1] : vector<8x128xf32> to vector<8xf32>
    %166 = vector.shape_cast %165 : vector<8xf32> to vector<8x1xf32>
    %cst_82 = arith.constant 9.99999996E-13 : f32
    %167 = vector.broadcast %cst_82 : f32 to vector<8x1xf32>
    %168 = arith.addf %166, %167 : vector<8x1xf32>
    %169 = math.rsqrt %168 : vector<8x1xf32>
    %170 = vector.broadcast %169 : vector<8x1xf32> to vector<8x128xf32>
    %171 = arith.mulf %163, %170 : vector<8x128xf32>
    %172 = vector.extract_strided_slice %171 {offsets = [0, 0], sizes = [2, 128], strides = [1, 1]} : vector<8x128xf32> to vector<2x128xf32>
    %c0_83 = arith.constant 0 : index
    %c0_84 = arith.constant 0 : index
    %173 = vector.load %arg24[%c0_83, %c0_84] : memref<2x128xf32, #tpu.memory_space<vmem>>, vector<2x128xf32>
    tpu.vector_store %arg24[%c0_83, %c0_84], %172 {strides = array<i32>} : memref<2x128xf32, #tpu.memory_space<vmem>>, vector<2x128xf32>,
    return
  }
  func.func @transform_0(%arg0: i32, %arg1: memref<2xi32, #tpu.memory_space<smem>>) -> (i32, i32) {
    %c0_i32 = arith.constant 0 : i32
    %c0_i32_0 = arith.constant 0 : i32
    %c0_i32_1 = arith.constant 0 : i32
    return %c0_i32, %c0_i32_0 : i32, i32
  }
  func.func @transform_1(%arg0: i32, %arg1: memref<2xi32, #tpu.memory_space<smem>>) -> (i32, i32) {
    %c0_i32 = arith.constant 0 : i32
    %c0_i32_0 = arith.constant 0 : i32
    %c0_i32_1 = arith.constant 0 : i32
    return %c0_i32, %c0_i32_0 : i32, i32
  }
  func.func @transform_2(%arg0: i32, %arg1: memref<2xi32, #tpu.memory_space<smem>>) -> (i32, i32) {
    %c0_i32 = arith.constant 0 : i32
    %c0_i32_0 = arith.constant 0 : i32
    %c0_i32_1 = arith.constant 0 : i32
    return %c0_i32, %c0_i32_0 : i32, i32
  }
  func.func @transform_3(%arg0: i32, %arg1: memref<2xi32, #tpu.memory_space<smem>>) -> (i32, i32) {
    %c0_i32 = arith.constant 0 : i32
    %c0_i32_0 = arith.constant 0 : i32
    %c0_i32_1 = arith.constant 0 : i32
    return %c0_i32, %c0_i32_0 : i32, i32
  }
  func.func @transform_4(%arg0: i32, %arg1: memref<2xi32, #tpu.memory_space<smem>>) -> (i32, i32) {
    %c0_i32 = arith.constant 0 : i32
    %c0_i32_0 = arith.constant 0 : i32
    %c0_i32_1 = arith.constant 0 : i32
    return %c0_i32, %c0_i32_0 : i32, i32
  }
  func.func @transform_5(%arg0: i32, %arg1: memref<2xi32, #tpu.memory_space<smem>>) -> (i32, i32) {
    %c0_i32 = arith.constant 0 : i32
    %c0_i32_0 = arith.constant 0 : i32
    %c0_i32_1 = arith.constant 0 : i32
    return %c0_i32, %c0_i32_0 : i32, i32
  }
  func.func @transform_6(%arg0: i32, %arg1: memref<2xi32, #tpu.memory_space<smem>>) -> (i32, i32) {
    %c0_i32 = arith.constant 0 : i32
    %c0_i32_0 = arith.constant 0 : i32
    %c0_i32_1 = arith.constant 0 : i32
    return %c0_i32, %c0_i32_0 : i32, i32
  }
  func.func @transform_7(%arg0: i32, %arg1: memref<2xi32, #tpu.memory_space<smem>>) -> (i32, i32) {
    %c0_i32 = arith.constant 0 : i32
    %c0_i32_0 = arith.constant 0 : i32
    %c0_i32_1 = arith.constant 0 : i32
    return %c0_i32, %c0_i32_0 : i32, i32
  }
  func.func @transform_8(%arg0: i32, %arg1: memref<2xi32, #tpu.memory_space<smem>>) -> (i32, i32) {
    %c0_i32 = arith.constant 0 : i32
    %c0_i32_0 = arith.constant 0 : i32
    %c0_i32_1 = arith.constant 0 : i32
    return %c0_i32, %c0_i32_0 : i32, i32
  }
  func.func @transform_9(%arg0: i32, %arg1: memref<2xi32, #tpu.memory_space<smem>>) -> (i32, i32) {
    %c0_i32 = arith.constant 0 : i32
    %c0_i32_0 = arith.constant 0 : i32
    %c0_i32_1 = arith.constant 0 : i32
    return %c0_i32, %c0_i32_0 : i32, i32
  }
  func.func @transform_10(%arg0: i32, %arg1: memref<2xi32, #tpu.memory_space<smem>>) -> (i32, i32) {
    %c0_i32 = arith.constant 0 : i32
    %c0_i32_0 = arith.constant 0 : i32
    %c0_i32_1 = arith.constant 0 : i32
    return %c0_i32, %c0_i32_0 : i32, i32
  }
  func.func @transform_11(%arg0: i32, %arg1: memref<2xi32, #tpu.memory_space<smem>>) -> (i32, i32) {
    %c0_i32 = arith.constant 0 : i32
    %c0_i32_0 = arith.constant 0 : i32
    %c0_i32_1 = arith.constant 0 : i32
    return %c0_i32, %c0_i32_0 : i32, i32
  }
  func.func @transform_12(%arg0: i32, %arg1: memref<2xi32, #tpu.memory_space<smem>>) -> (i32, i32) {
    %c0_i32 = arith.constant 0 : i32
    %c0_i32_0 = arith.constant 0 : i32
    %c0_i32_1 = arith.constant 0 : i32
    return %c0_i32, %c0_i32_0 : i32, i32
  }
  func.func @transform_13(%arg0: i32, %arg1: memref<2xi32, #tpu.memory_space<smem>>) -> (i32, i32) {
    %c0_i32 = arith.constant 0 : i32
    %c0_i32_0 = arith.constant 0 : i32
    %c0_i32_1 = arith.constant 0 : i32
    return %c0_i32, %c0_i32_0 : i32, i32
  }
  func.func @transform_14(%arg0: i32, %arg1: memref<2xi32, #tpu.memory_space<smem>>) -> (i32, i32) {
    %c0_i32 = arith.constant 0 : i32
    %c0_i32_0 = arith.constant 0 : i32
    %c0_i32_1 = arith.constant 0 : i32
    return %c0_i32, %c0_i32_0 : i32, i32
  }
  func.func @transform_15(%arg0: i32, %arg1: memref<2xi32, #tpu.memory_space<smem>>) -> (i32, i32) {
    %c0_i32 = arith.constant 0 : i32
    %c0_i32_0 = arith.constant 0 : i32
    %c0_i32_1 = arith.constant 0 : i32
    return %c0_i32, %c0_i32_0 : i32, i32
  }
  func.func @transform_16(%arg0: i32, %arg1: memref<2xi32, #tpu.memory_space<smem>>) -> (i32, i32) {
    %c0_i32 = arith.constant 0 : i32
    %c0_i32_0 = arith.constant 0 : i32
    %c0_i32_1 = arith.constant 0 : i32
    return %c0_i32, %c0_i32_0 : i32, i32
  }
  func.func @transform_17(%arg0: i32, %arg1: memref<2xi32, #tpu.memory_space<smem>>) -> (i32, i32) {
    %c0_i32 = arith.constant 0 : i32
    %c0_i32_0 = arith.constant 0 : i32
    %c0_i32_1 = arith.constant 0 : i32
    return %c0_i32, %c0_i32_0 : i32, i32
  }
  func.func @transform_18(%arg0: i32, %arg1: memref<2xi32, #tpu.memory_space<smem>>) -> (i32, i32) {
    %c0_i32 = arith.constant 0 : i32
    %c0_i32_0 = arith.constant 0 : i32
    %c0_i32_1 = arith.constant 0 : i32
    return %c0_i32, %c0_i32_0 : i32, i32
  }
  func.func @transform_19(%arg0: i32, %arg1: memref<2xi32, #tpu.memory_space<smem>>) -> (i32, i32) {
    %c0_i32 = arith.constant 0 : i32
    %c0_i32_0 = arith.constant 0 : i32
    %c0_i32_1 = arith.constant 0 : i32
    return %c0_i32, %c0_i32_0 : i32, i32
  }
  func.func @transform_20(%arg0: i32, %arg1: memref<2xi32, #tpu.memory_space<smem>>) -> (i32, i32) {
    %c0_i32 = arith.constant 0 : i32
    %c0_i32_0 = arith.constant 0 : i32
    %c0_i32_1 = arith.constant 0 : i32
    return %c0_i32, %c0_i32_0 : i32, i32
  }
  func.func @transform_21(%arg0: i32, %arg1: memref<2xi32, #tpu.memory_space<smem>>) -> (i32, i32) {
    %c0_i32 = arith.constant 0 : i32
    %c0_i32_0 = arith.constant 0 : i32
    %c0_i32_1 = arith.constant 0 : i32
    return %c0_i32, %c0_i32_0 : i32, i32
  }
  func.func @transform_22(%arg0: i32, %arg1: memref<2xi32, #tpu.memory_space<smem>>) -> (i32, i32) {
    %c0_i32 = arith.constant 0 : i32
    %c0_i32_0 = arith.constant 0 : i32
    %c0_i32_1 = arith.constant 0 : i32
    return %c0_i32, %c0_i32_0 : i32, i32
  }
}

</mosaic_0001>

<llo_original>
// kernel: fromage_forward.1
$region0: #{fromage_forward.1}
  #allocation0 [shape = 'u32[]', space=smem, size = 0x4, offset = 0x4, fixed_abs, tag = 'smem constant byte address 0x4 - core index']
  #allocation1 [shape = 'u32[144,128]{1,0:T(1,128)}', space=vmem, size = 0x12000, scoped, tag = 'internal scratch']
  #allocation2 [shape = 's32[1]{0}', space=sflag, size = 0x4, scoped, tag = 'scoped memory for fromage_forward.1']
  #allocation3 [shape = 'u8[512]{0}', space=smem, size = 0x200, scoped, tag = 'prefetched SMEM operand 0']
  %s0 = inlined_call_operand.vmem [shape: s32[2], index: 0, kind: input, shape index: {}]
  %s1 = inlined_call_operand.vmem [shape: bf16[8,256], index: 1, kind: input, shape index: {}]
  %s2 = inlined_call_operand.vmem [shape: bf16[256,128], index: 2, kind: input, shape index: {}]
  %s3 = inlined_call_operand.vmem [shape: bf16[1,128], index: 3, kind: input, shape index: {}]
  %s4 = inlined_call_operand.vmem [shape: bf16[128,128], index: 4, kind: input, shape index: {}]
  %s5 = inlined_call_operand.vmem [shape: bf16[1,128], index: 5, kind: input, shape index: {}]
  %s6 = inlined_call_operand.vmem [shape: bf16[128,128], index: 6, kind: input, shape index: {}]
  %s7 = inlined_call_operand.vmem [shape: bf16[1,128], index: 7, kind: input, shape index: {}]
  %s8 = inlined_call_operand.vmem [shape: bf16[128,128], index: 8, kind: input, shape index: {}]
  %s9 = inlined_call_operand.vmem [shape: s32[16,1], index: 9, kind: input, shape index: {}]
  %s10 = inlined_call_operand.vmem [shape: s32[16,1], index: 10, kind: input, shape index: {}]
  %s11 = inlined_call_operand.vmem [shape: bf16[128,128], index: 11, kind: input, shape index: {}]
  %s12 = inlined_call_operand.vmem [shape: bf16[1,128], index: 12, kind: input, shape index: {}]
  %s13 = inlined_call_operand.vmem [shape: bf16[128,128], index: 13, kind: input, shape index: {}]
  %s14 = inlined_call_operand.vmem [shape: bf16[1,128], index: 14, kind: input, shape index: {}]
  %s15 = inlined_call_operand.vmem [shape: bf16[128,128], index: 15, kind: input, shape index: {}]
  %s16 = inlined_call_operand.vmem [shape: f32[1,128], index: 16, kind: input, shape index: {}]
  %s17 = inlined_call_operand.vmem [shape: bf16[128,128], index: 17, kind: input, shape index: {}]
  %s18 = inlined_call_operand.vmem [shape: bf16[1,128], index: 18, kind: input, shape index: {}]
  %s19 = inlined_call_operand.vmem [shape: f32[16,128], index: 19, kind: output, shape index: {0}]
  %s20 = inlined_call_operand.vmem [shape: f32[16,128], index: 20, kind: output, shape index: {1}]
  %s21 = inlined_call_operand.hbm [shape: f32[1,1], index: 21, kind: output, shape index: {2}]
  %s22 = inlined_call_operand.vmem [shape: f32[2,128], index: 22, kind: output, shape index: {3}]
  %s23 = inlined_call_operand.hbm [shape: f32[2,128], index: 23, kind: output, shape index: {4}]
  %24 = xla_tuple %s19, %s20, %s21, %s22, %s23
  %s25 = sld [smem:[#allocation0]]
  $region114: #{fromage_forward.1} parent=0
    _
  %s27 = ssub.s32 1, %s25
  %s28 = scalar_select 0, %s27, %s25
  %s29 = sshll.u32 %s0, 4
  %s30 = int_to_ptr.vmem [resolvable:$true] %s29
  %32 = dma.vmem_to_smem %s30, 16, [#allocation3], [#allocation2]
  %33 = dma.done [#allocation2], 16
  %34 = sfence
  $region1: #{fromage_forward.1} parent=0
    #allocation4 [shape = 'u8[512]{0}', space=vmem, size = 0x400, scoped, tag = 'output window, operand 2, single buffered']
    #allocation5 [shape = 's32[1]{0}', space=sflag, size = 0x4, scoped, tag = 'scoped memory for fromage_forward.1']
    #allocation6 [shape = 'u8[1024]{0}', space=vmem, size = 0x400, scoped, tag = 'output window, operand 4, single buffered']
    #allocation7 [shape = 's32[1]{0}', space=sflag, size = 0x4, scoped, tag = 'scoped memory for fromage_forward.1']
    %35 = vsyncpa [#allocation5], 0
    %36 = vsyncpa [#allocation7], 0
    // Predicated region
    $region2: #{fromage_forward.1} parent=1 // pred_check
      _
    $region3: #{fromage_forward.1} parent=1 // pred_check_branch
      %38 = sbr.rel (0) target = $region5
    $region4: #{fromage_forward.1} parent=1 // pred_region
      _
    $region5: #{fromage_forward.1} parent=1 // pred_fallthru
      _
    // Predicated region
    $region6: #{fromage_forward.1} parent=1 // pred_check
      _
    $region7: #{fromage_forward.1} parent=1 // pred_check_branch
      %40 = sbr.rel (0) target = $region9
    $region8: #{fromage_forward.1} parent=1 // pred_region
      _
    $region9: #{fromage_forward.1} parent=1 // pred_fallthru
      _
    // Predicated region
    $region10: #{fromage_forward.1} parent=1 // pred_check
      _
    $region11: #{fromage_forward.1} parent=1 // pred_check_branch
      %42 = sbr.rel (0) target = $region13
    $region12: #{fromage_forward.1} parent=1 // pred_region
      _
    $region13: #{fromage_forward.1} parent=1 // pred_fallthru
      _
    // Predicated region
    $region14: #{fromage_forward.1} parent=1 // pred_check
      _
    $region15: #{fromage_forward.1} parent=1 // pred_check_branch
      %44 = sbr.rel (0) target = $region17
    $region16: #{fromage_forward.1} parent=1 // pred_region
      _
    $region17: #{fromage_forward.1} parent=1 // pred_fallthru
      _
    // Predicated region
    $region18: #{fromage_forward.1} parent=1 // pred_check
      _
    $region19: #{fromage_forward.1} parent=1 // pred_check_branch
      %46 = sbr.rel (0) target = $region21
    $region20: #{fromage_forward.1} parent=1 // pred_region
      _
    $region21: #{fromage_forward.1} parent=1 // pred_fallthru
      _
    // Predicated region
    $region22: #{fromage_forward.1} parent=1 // pred_check
      _
    $region23: #{fromage_forward.1} parent=1 // pred_check_branch
      %48 = sbr.rel (0) target = $region25
    $region24: #{fromage_forward.1} parent=1 // pred_region
      _
    $region25: #{fromage_forward.1} parent=1 // pred_fallthru
      _
    // Predicated region
    $region26: #{fromage_forward.1} parent=1 // pred_check
      _
    $region27: #{fromage_forward.1} parent=1 // pred_check_branch
      %50 = sbr.rel (0) target = $region29
    $region28: #{fromage_forward.1} parent=1 // pred_region
      _
    $region29: #{fromage_forward.1} parent=1 // pred_fallthru
      _
    // Predicated region
    $region30: #{fromage_forward.1} parent=1 // pred_check
      _
    $region31: #{fromage_forward.1} parent=1 // pred_check_branch
      %52 = sbr.rel (0) target = $region33
    $region32: #{fromage_forward.1} parent=1 // pred_region
      _
    $region33: #{fromage_forward.1} parent=1 // pred_fallthru
      _
    // Predicated region
    $region34: #{fromage_forward.1} parent=1 // pred_check
      _
    $region35: #{fromage_forward.1} parent=1 // pred_check_branch
      %54 = sbr.rel (0) target = $region37
    $region36: #{fromage_forward.1} parent=1 // pred_region
      _
    $region37: #{fromage_forward.1} parent=1 // pred_fallthru
      _
    // Predicated region
    $region38: #{fromage_forward.1} parent=1 // pred_check
      _
    $region39: #{fromage_forward.1} parent=1 // pred_check_branch
      %56 = sbr.rel (0) target = $region41
    $region40: #{fromage_forward.1} parent=1 // pred_region
      _
    $region41: #{fromage_forward.1} parent=1 // pred_fallthru
      _
    // Predicated region
    $region42: #{fromage_forward.1} parent=1 // pred_check
      _
    $region43: #{fromage_forward.1} parent=1 // pred_check_branch
      %58 = sbr.rel (0) target = $region45
    $region44: #{fromage_forward.1} parent=1 // pred_region
      _
    $region45: #{fromage_forward.1} parent=1 // pred_fallthru
      _
    // Predicated region
    $region46: #{fromage_forward.1} parent=1 // pred_check
      _
    $region47: #{fromage_forward.1} parent=1 // pred_check_branch
      %60 = sbr.rel (0) target = $region49
    $region48: #{fromage_forward.1} parent=1 // pred_region
      _
    $region49: #{fromage_forward.1} parent=1 // pred_fallthru
      _
    // Predicated region
    $region50: #{fromage_forward.1} parent=1 // pred_check
      _
    $region51: #{fromage_forward.1} parent=1 // pred_check_branch
      %62 = sbr.rel (0) target = $region53
    $region52: #{fromage_forward.1} parent=1 // pred_region
      _
    $region53: #{fromage_forward.1} parent=1 // pred_fallthru
      _
    // Predicated region
    $region54: #{fromage_forward.1} parent=1 // pred_check
      _
    $region55: #{fromage_forward.1} parent=1 // pred_check_branch
      %64 = sbr.rel (0) target = $region57
    $region56: #{fromage_forward.1} parent=1 // pred_region
      _
    $region57: #{fromage_forward.1} parent=1 // pred_fallthru
      _
    // Predicated region
    $region58: #{fromage_forward.1} parent=1 // pred_check
      _
    $region59: #{fromage_forward.1} parent=1 // pred_check_branch
      %66 = sbr.rel (0) target = $region61
    $region60: #{fromage_forward.1} parent=1 // pred_region
      _
    $region61: #{fromage_forward.1} parent=1 // pred_fallthru
      _
    // Predicated region
    $region62: #{fromage_forward.1} parent=1 // pred_check
      _
    $region63: #{fromage_forward.1} parent=1 // pred_check_branch
      %68 = sbr.rel (0) target = $region65
    $region64: #{fromage_forward.1} parent=1 // pred_region
      _
    $region65: #{fromage_forward.1} parent=1 // pred_fallthru
      _
    // Predicated region
    $region66: #{fromage_forward.1} parent=1 // pred_check
      _
    $region67: #{fromage_forward.1} parent=1 // pred_check_branch
      %70 = sbr.rel (0) target = $region69
    $region68: #{fromage_forward.1} parent=1 // pred_region
      _
    $region69: #{fromage_forward.1} parent=1 // pred_fallthru
      _
    // Predicated region
    $region70: #{fromage_forward.1} parent=1 // pred_check
      _
    $region71: #{fromage_forward.1} parent=1 // pred_check_branch
      %72 = sbr.rel (0) target = $region73
    $region72: #{fromage_forward.1} parent=1 // pred_region
      _
    $region73: #{fromage_forward.1} parent=1 // pred_fallthru
      _
    %v74 = vld [vmem:[%s1] sm:$0xff]
    %v75 = vld [vmem:[%s2] sm:$0xf]
    %v76 = vld [vmem:[%s2 + $0x4] sm:$0xf]
    %v77 = vld [vmem:[%s2 + $0x8] sm:$0xf]
    %v78 = vld [vmem:[%s2 + $0xc] sm:$0xf]
    %v79 = vld [vmem:[%s2 + $0x10] sm:$0xf]
    %v80 = vld [vmem:[%s2 + $0x14] sm:$0xf]
    %v81 = vld [vmem:[%s2 + $0x18] sm:$0xf]
    %v82 = vld [vmem:[%s2 + $0x1c] sm:$0xf]
    %v83 = vld [vmem:[%s2 + $0x20] sm:$0xf]
    %v84 = vld [vmem:[%s2 + $0x24] sm:$0xf]
    %v85 = vld [vmem:[%s2 + $0x28] sm:$0xf]
    %v86 = vld [vmem:[%s2 + $0x2c] sm:$0xf]
    %v87 = vld [vmem:[%s2 + $0x30] sm:$0xf]
    %v88 = vld [vmem:[%s2 + $0x34] sm:$0xf]
    %v89 = vld [vmem:[%s2 + $0x38] sm:$0xf]
    %v90 = vld [vmem:[%s2 + $0x3c] sm:$0xf]
    %v91 = vld [vmem:[%s2 + $0x40] sm:$0xf]
    %v92 = vld [vmem:[%s2 + $0x44] sm:$0xf]
    %v93 = vld [vmem:[%s2 + $0x48] sm:$0xf]
    %v94 = vld [vmem:[%s2 + $0x4c] sm:$0xf]
    %v95 = vld [vmem:[%s2 + $0x50] sm:$0xf]
    %v96 = vld [vmem:[%s2 + $0x54] sm:$0xf]
    %v97 = vld [vmem:[%s2 + $0x58] sm:$0xf]
    %v98 = vld [vmem:[%s2 + $0x5c] sm:$0xf]
    %v99 = vld [vmem:[%s2 + $0x60] sm:$0xf]
    %v100 = vld [vmem:[%s2 + $0x64] sm:$0xf]
    %v101 = vld [vmem:[%s2 + $0x68] sm:$0xf]
    %v102 = vld [vmem:[%s2 + $0x6c] sm:$0xf]
    %v103 = vld [vmem:[%s2 + $0x70] sm:$0xf]
    %v104 = vld [vmem:[%s2 + $0x74] sm:$0xf]
    %v105 = vld [vmem:[%s2 + $0x78] sm:$0xf]
    %v106 = vld [vmem:[%s2 + $0x7c] sm:$0xf]
    %v107 = vld [vmem:[%s3] sm:$0x1]
    %v108 = vunpack.c.l.bf16 %v107
    %v109 = vlaneseq
    %v110 = vshrl.u32 %v109, 7
    %v111 = vsub.s32 0, %v110
    %v112 = vrot.slane %v108, %v111
    %v114 = vunpack.c.l.b16 %v74
    %v115 = vunpack.c.h.b16 %v74
    %v116 = vpack.c.b16 %v114, %v114
    %v117 = vpack.c.b16 %v115, %v115
    %v152 = vunpack.c.l.b16 %v75
    %v153 = vunpack.c.l.b16 %v76
    %v154 = vunpack.c.l.b16 %v77
    %v155 = vunpack.c.l.b16 %v78
    %v156 = vunpack.c.l.b16 %v79
    %v157 = vunpack.c.l.b16 %v80
    %v158 = vunpack.c.l.b16 %v81
    %v159 = vunpack.c.l.b16 %v82
    %v160 = vunpack.c.l.b16 %v83
    %v161 = vunpack.c.l.b16 %v84
    %v162 = vunpack.c.l.b16 %v85
    %v163 = vunpack.c.l.b16 %v86
    %v164 = vunpack.c.l.b16 %v87
    %v165 = vunpack.c.l.b16 %v88
    %v166 = vunpack.c.l.b16 %v89
    %v167 = vunpack.c.l.b16 %v90
    %v168 = vunpack.c.l.b16 %v91
    %v169 = vunpack.c.l.b16 %v92
    %v170 = vunpack.c.l.b16 %v93
    %v171 = vunpack.c.l.b16 %v94
    %v172 = vunpack.c.l.b16 %v95
    %v173 = vunpack.c.l.b16 %v96
    %v174 = vunpack.c.l.b16 %v97
    %v175 = vunpack.c.l.b16 %v98
    %v176 = vunpack.c.l.b16 %v99
    %v177 = vunpack.c.l.b16 %v100
    %v178 = vunpack.c.l.b16 %v101
    %v179 = vunpack.c.l.b16 %v102
    %v180 = vunpack.c.l.b16 %v103
    %v181 = vunpack.c.l.b16 %v104
    %v182 = vunpack.c.l.b16 %v105
    %v183 = vunpack.c.l.b16 %v106
    %v184 = vpack.c.b16 %v153, %v152
    %v185 = vpack.c.b16 %v155, %v154
    %v186 = vpack.c.b16 %v157, %v156
    %v187 = vpack.c.b16 %v159, %v158
    %v188 = vpack.c.b16 %v161, %v160
    %v189 = vpack.c.b16 %v163, %v162
    %v190 = vpack.c.b16 %v165, %v164
    %v191 = vpack.c.b16 %v167, %v166
    %v192 = vpack.c.b16 %v169, %v168
    %v193 = vpack.c.b16 %v171, %v170
    %v194 = vpack.c.b16 %v173, %v172
    %v195 = vpack.c.b16 %v175, %v174
    %v196 = vpack.c.b16 %v177, %v176
    %v197 = vpack.c.b16 %v179, %v178
    %v198 = vpack.c.b16 %v181, %v180
    %v199 = vpack.c.b16 %v183, %v182
    %216 = vmatprep.subr.bf16.mxu0 0
    %217 = vmatpush1.bf16.msra.mxu0 %v184
    %218 = vmatprep.subr.bf16.mxu0 0
    %219 = vmatpush1.bf16.msra.mxu0 %v185
    %220 = vmatprep.subr.bf16.mxu0 0
    %221 = vmatpush1.bf16.msra.mxu0 %v186
    %222 = vmatprep.subr.bf16.mxu0 0
    %223 = vmatpush1.bf16.msra.mxu0 %v187
    %224 = vmatprep.subr.bf16.mxu0 0
    %225 = vmatpush1.bf16.msra.mxu0 %v188
    %226 = vmatprep.subr.bf16.mxu0 0
    %227 = vmatpush1.bf16.msra.mxu0 %v189
    %228 = vmatprep.subr.bf16.mxu0 0
    %229 = vmatpush1.bf16.msra.mxu0 %v190
    %230 = vmatprep.subr.bf16.mxu0 0
    %231 = vmatpush1.bf16.msra.mxu0 %v191
    %232 = vmatprep.subr.bf16.mxu0 0
    %233 = vmatpush1.bf16.msra.mxu0 %v192
    %234 = vmatprep.subr.bf16.mxu0 0
    %235 = vmatpush1.bf16.msra.mxu0 %v193
    %236 = vmatprep.subr.bf16.mxu0 0
    %237 = vmatpush1.bf16.msra.mxu0 %v194
    %238 = vmatprep.subr.bf16.mxu0 0
    %239 = vmatpush1.bf16.msra.mxu0 %v195
    %240 = vmatprep.subr.bf16.mxu0 0
    %241 = vmatpush1.bf16.msra.mxu0 %v196
    %242 = vmatprep.subr.bf16.mxu0 0
    %243 = vmatpush1.bf16.msra.mxu0 %v197
    %244 = vmatprep.subr.bf16.mxu0 0
    %245 = vmatpush1.bf16.msra.mxu0 %v198
    %246 = vmatprep.subr.bf16.mxu0 0
    %247 = vmatpush1.bf16.msra.mxu0 %v199
    %248 = vmatprep.mubr.bf16.mxu0 %v117
    %249 = vmatmul.mubr.bf16.gmra.mrb[0].mxu0 %v116
    %v250 = vpop.f32.mrb[0].mxu0
    %v251 = vadd.f32 %v112, %v250
    %v252 = vpop.f32.mrb[0].mxu0
    %v253 = vpop.f32.mrb[0].mxu0
    %v254 = vpop.f32.mrb[0].mxu0
    %255 = vdwg.mxu0
    %v256 = vpack.c.bf16 %v251, %v251
    %v257 = vld [vmem:[%s4] sm:$0xf]
    %v258 = vld [vmem:[%s4 + $0x4] sm:$0xf]
    %v259 = vld [vmem:[%s4 + $0x8] sm:$0xf]
    %v260 = vld [vmem:[%s4 + $0xc] sm:$0xf]
    %v261 = vld [vmem:[%s4 + $0x10] sm:$0xf]
    %v262 = vld [vmem:[%s4 + $0x14] sm:$0xf]
    %v263 = vld [vmem:[%s4 + $0x18] sm:$0xf]
    %v264 = vld [vmem:[%s4 + $0x1c] sm:$0xf]
    %v265 = vld [vmem:[%s4 + $0x20] sm:$0xf]
    %v266 = vld [vmem:[%s4 + $0x24] sm:$0xf]
    %v267 = vld [vmem:[%s4 + $0x28] sm:$0xf]
    %v268 = vld [vmem:[%s4 + $0x2c] sm:$0xf]
    %v269 = vld [vmem:[%s4 + $0x30] sm:$0xf]
    %v270 = vld [vmem:[%s4 + $0x34] sm:$0xf]
    %v271 = vld [vmem:[%s4 + $0x38] sm:$0xf]
    %v272 = vld [vmem:[%s4 + $0x3c] sm:$0xf]
    %v273 = vld [vmem:[%s5] sm:$0x1]
    %v274 = vunpack.c.l.bf16 %v273
    %v275 = vlaneseq
    %v276 = vshrl.u32 %v275, 7
    %v277 = vsub.s32 0, %v276
    %v278 = vrot.slane %v274, %v277
    %v295 = vunpack.c.l.b16 %v257
    %v296 = vunpack.c.l.b16 %v258
    %v297 = vunpack.c.l.b16 %v259
    %v298 = vunpack.c.l.b16 %v260
    %v299 = vunpack.c.l.b16 %v261
    %v300 = vunpack.c.l.b16 %v262
    %v301 = vunpack.c.l.b16 %v263
    %v302 = vunpack.c.l.b16 %v264
    %v303 = vunpack.c.l.b16 %v265
    %v304 = vunpack.c.l.b16 %v266
    %v305 = vunpack.c.l.b16 %v267
    %v306 = vunpack.c.l.b16 %v268
    %v307 = vunpack.c.l.b16 %v269
    %v308 = vunpack.c.l.b16 %v270
    %v309 = vunpack.c.l.b16 %v271
    %v310 = vunpack.c.l.b16 %v272
    %v311 = vpack.c.b16 %v296, %v295
    %v312 = vpack.c.b16 %v298, %v297
    %v313 = vpack.c.b16 %v300, %v299
    %v314 = vpack.c.b16 %v302, %v301
    %v315 = vpack.c.b16 %v304, %v303
    %v316 = vpack.c.b16 %v306, %v305
    %v317 = vpack.c.b16 %v308, %v307
    %v318 = vpack.c.b16 %v310, %v309
    %327 = vmatprep.subr.bf16.mxu0 0
    %328 = vmatpush1.bf16.msra.mxu0 %v311
    %329 = vmatprep.subr.bf16.mxu0 0
    %330 = vmatpush1.bf16.msra.mxu0 %v312
    %331 = vmatprep.subr.bf16.mxu0 0
    %332 = vmatpush1.bf16.msra.mxu0 %v313
    %333 = vmatprep.subr.bf16.mxu0 0
    %334 = vmatpush1.bf16.msra.mxu0 %v314
    %335 = vmatprep.subr.bf16.mxu0 0
    %336 = vmatpush1.bf16.msra.mxu0 %v315
    %337 = vmatprep.subr.bf16.mxu0 0
    %338 = vmatpush1.bf16.msra.mxu0 %v316
    %339 = vmatprep.subr.bf16.mxu0 0
    %340 = vmatpush1.bf16.msra.mxu0 %v317
    %341 = vmatprep.subr.bf16.mxu0 0
    %342 = vmatpush1.bf16.msra.mxu0 %v318
    %343 = vmatprep.subr.bf16.mxu0 0
    %344 = vmatpush1.bf16.msra.mxu0 0
    %345 = vmatprep.subr.bf16.mxu0 0
    %346 = vmatpush1.bf16.msra.mxu0 0
    %347 = vmatprep.subr.bf16.mxu0 0
    %348 = vmatpush1.bf16.msra.mxu0 0
    %349 = vmatprep.subr.bf16.mxu0 0
    %350 = vmatpush1.bf16.msra.mxu0 0
    %351 = vmatprep.subr.bf16.mxu0 0
    %352 = vmatpush1.bf16.msra.mxu0 0
    %353 = vmatprep.subr.bf16.mxu0 0
    %354 = vmatpush1.bf16.msra.mxu0 0
    %355 = vmatprep.subr.bf16.mxu0 0
    %356 = vmatpush1.bf16.msra.mxu0 0
    %357 = vmatprep.subr.bf16.mxu0 0
    %358 = vmatpush1.bf16.msra.mxu0 0
    %359 = vmatprep.mubr.bf16.mxu0 0
    %360 = vmatmul.mubr.bf16.gmra.mrb[0].mxu0 %v256
    %v361 = vpop.f32.mrb[0].mxu0
    %v362 = vadd.f32 %v278, %v361
    %v363 = vpop.f32.mrb[0].mxu0
    %v364 = vpop.f32.mrb[0].mxu0
    %v365 = vpop.f32.mrb[0].mxu0
    %366 = vdwg.mxu0
    %v367 = vmul.f32 %v362, %v362
    %v368 = vmul.f32 %v362, %v367
    %v369 = vmul.f32 %v368, 0.044715
    %v370 = vadd.f32 %v362, %v369
    %v371 = vmul.f32 %v370, 0.7978846
    %v372 = vtanh.pop %v371
    %v373 = vadd.f32 %v372, 1.0
    %v374 = vmul.f32 %v373, 0.5
    %v375 = vmul.f32 %v362, %v374
    %vm376 = vcmask 1043456
    %v377 = vsel %vm376, %v375, 0.0
    %v378 = vrot.slane %v377, 4
    %v379 = vadd.f32 %v377, %v378
    %v380 = vrot.slane %v379, 2
    %v381 = vadd.f32 %v379, %v380
    %v382 = vrot.slane %v381, 1
    %v383 = vadd.f32 %v381, %v382
    %v384 = vmul.f32 %v383, 0.25
    %v386 = vrot.slane %v375, 4
    %v388 = vsel %vm376, %v386, 0.0
    %v389 = vrot.slane %v388, 4
    %v390 = vadd.f32 %v388, %v389
    %v391 = vrot.slane %v390, 2
    %v392 = vadd.f32 %v390, %v391
    %v393 = vrot.slane %v392, 1
    %v394 = vadd.f32 %v392, %v393
    %v395 = vmul.f32 %v394, 0.25
    %vm396 = vcmask 1040384
    %v397 = vsel %vm396, %v384, %v395
    %vm398 = vcmask 1041408
    %v399 = vsel %vm398, %v397, 0.0
    %400 = vadd.xlane.f32.xlu0 %v399
    %v401 = vpop.xlane.xlu0 %400
    %v402 = vmul.f32 %v401, 0.03125
    %v403 = vmul.f32 %v399, %v399
    %404 = vadd.xlane.f32.xlu0 %v403
    %v405 = vpop.xlane.xlu0 %404
    %v406 = vmul.f32 %v405, 0.03125
    %v407 = vmul.f32 %v402, %v402
    %v408 = vsub.f32 %v406, %v407
    %v409 = vsub.f32 %v399, %v402
    %v410 = vadd.f32 %v408, 1e-05
    %v411 = vrsqrt.pop %v410
    %v412 = vmul.f32 %v409, %v411
    %v413 = vpack.c.bf16 %v412, %v412
    %v414 = vld [vmem:[%s6] sm:$0xf]
    %v415 = vld [vmem:[%s6 + $0x4] sm:$0xf]
    %v416 = vld [vmem:[%s6 + $0x8] sm:$0xf]
    %v417 = vld [vmem:[%s6 + $0xc] sm:$0xf]
    %v418 = vld [vmem:[%s6 + $0x10] sm:$0xf]
    %v419 = vld [vmem:[%s6 + $0x14] sm:$0xf]
    %v420 = vld [vmem:[%s6 + $0x18] sm:$0xf]
    %v421 = vld [vmem:[%s6 + $0x1c] sm:$0xf]
    %v422 = vld [vmem:[%s6 + $0x20] sm:$0xf]
    %v423 = vld [vmem:[%s6 + $0x24] sm:$0xf]
    %v424 = vld [vmem:[%s6 + $0x28] sm:$0xf]
    %v425 = vld [vmem:[%s6 + $0x2c] sm:$0xf]
    %v426 = vld [vmem:[%s6 + $0x30] sm:$0xf]
    %v427 = vld [vmem:[%s6 + $0x34] sm:$0xf]
    %v428 = vld [vmem:[%s6 + $0x38] sm:$0xf]
    %v429 = vld [vmem:[%s6 + $0x3c] sm:$0xf]
    %v430 = vld [vmem:[%s7] sm:$0x1]
    %v431 = vunpack.c.l.bf16 %v430
    %v432 = vlaneseq
    %v433 = vshrl.u32 %v432, 7
    %v434 = vsub.s32 0, %v433
    %v435 = vrot.slane %v431, %v434
    %v452 = vunpack.c.l.b16 %v414
    %v453 = vunpack.c.l.b16 %v415
    %v454 = vunpack.c.l.b16 %v416
    %v455 = vunpack.c.l.b16 %v417
    %v456 = vunpack.c.l.b16 %v418
    %v457 = vunpack.c.l.b16 %v419
    %v458 = vunpack.c.l.b16 %v420
    %v459 = vunpack.c.l.b16 %v421
    %v460 = vunpack.c.l.b16 %v422
    %v461 = vunpack.c.l.b16 %v423
    %v462 = vunpack.c.l.b16 %v424
    %v463 = vunpack.c.l.b16 %v425
    %v464 = vunpack.c.l.b16 %v426
    %v465 = vunpack.c.l.b16 %v427
    %v466 = vunpack.c.l.b16 %v428
    %v467 = vunpack.c.l.b16 %v429
    %v468 = vpack.c.b16 %v453, %v452
    %v469 = vpack.c.b16 %v455, %v454
    %v470 = vpack.c.b16 %v457, %v456
    %v471 = vpack.c.b16 %v459, %v458
    %v472 = vpack.c.b16 %v461, %v460
    %v473 = vpack.c.b16 %v463, %v462
    %v474 = vpack.c.b16 %v465, %v464
    %v475 = vpack.c.b16 %v467, %v466
    %484 = vmatprep.subr.bf16.mxu0 0
    %485 = vmatpush1.bf16.msra.mxu0 %v468
    %486 = vmatprep.subr.bf16.mxu0 0
    %487 = vmatpush1.bf16.msra.mxu0 %v469
    %488 = vmatprep.subr.bf16.mxu0 0
    %489 = vmatpush1.bf16.msra.mxu0 %v470
    %490 = vmatprep.subr.bf16.mxu0 0
    %491 = vmatpush1.bf16.msra.mxu0 %v471
    %492 = vmatprep.subr.bf16.mxu0 0
    %493 = vmatpush1.bf16.msra.mxu0 %v472
    %494 = vmatprep.subr.bf16.mxu0 0
    %495 = vmatpush1.bf16.msra.mxu0 %v473
    %496 = vmatprep.subr.bf16.mxu0 0
    %497 = vmatpush1.bf16.msra.mxu0 %v474
    %498 = vmatprep.subr.bf16.mxu0 0
    %499 = vmatpush1.bf16.msra.mxu0 %v475
    %500 = vmatprep.subr.bf16.mxu0 0
    %501 = vmatpush1.bf16.msra.mxu0 0
    %502 = vmatprep.subr.bf16.mxu0 0
    %503 = vmatpush1.bf16.msra.mxu0 0
    %504 = vmatprep.subr.bf16.mxu0 0
    %505 = vmatpush1.bf16.msra.mxu0 0
    %506 = vmatprep.subr.bf16.mxu0 0
    %507 = vmatpush1.bf16.msra.mxu0 0
    %508 = vmatprep.subr.bf16.mxu0 0
    %509 = vmatpush1.bf16.msra.mxu0 0
    %510 = vmatprep.subr.bf16.mxu0 0
    %511 = vmatpush1.bf16.msra.mxu0 0
    %512 = vmatprep.subr.bf16.mxu0 0
    %513 = vmatpush1.bf16.msra.mxu0 0
    %514 = vmatprep.subr.bf16.mxu0 0
    %515 = vmatpush1.bf16.msra.mxu0 0
    %516 = vmatprep.mubr.bf16.mxu0 0
    %517 = vmatmul.mubr.bf16.gmra.mrb[0].mxu0 %v413
    %v518 = vpop.f32.mrb[0].mxu0
    %v519 = vadd.f32 %v435, %v518
    %v520 = vpop.f32.mrb[0].mxu0
    %v521 = vpop.f32.mrb[0].mxu0
    %v522 = vpop.f32.mrb[0].mxu0
    %523 = vdwg.mxu0
    %v524 = vmul.f32 %v519, %v519
    %525 = vadd.xlane.f32.xlu0 %v524
    %v526 = vpop.xlane.xlu0 %525
    %v527 = vadd.f32 %v526, 1e-12
    %v528 = vrsqrt.pop %v527
    %v529 = vmul.f32 %v519, %v528
    %530 = vst [vmem:[%s22] sm:$0x3] %v529
    %v531 = vld [vmem:[%s9] sm:$0xff]
    %v532 = vld [vmem:[%s9 + $0x8] sm:$0xff]
    %v533 = vlaneseq
    %v534 = vand.u32 %v533, 127
    %535 = vset.pattern.permute.xlu0 0
    %536 = vperm.xlu0 %535, %v531
    %v537 = vpop.permute.xlu0 %536
    %538 = vset.pattern.permute.xlu0 0
    %539 = vperm.xlu0 %538, %v532
    %v540 = vpop.permute.xlu0 %539
    %vm541 = vcmp.eq.s32.totalorder %v534, %v537
    %vm542 = vcmp.eq.s32.totalorder %v534, %v540
    %v543 = vsel %vm541, 1, 0
    %v544 = vsel %vm542, 1, 0
    %v545 = vcvt.s32.f32 %v543
    %v546 = vcvt.s32.f32 %v544
    %v547 = vpack.c.bf16 %v546, %v545
    %v548 = vld [vmem:[%s8] sm:$0xf]
    %v549 = vld [vmem:[%s8 + $0x4] sm:$0xf]
    %v550 = vld [vmem:[%s8 + $0x8] sm:$0xf]
    %v551 = vld [vmem:[%s8 + $0xc] sm:$0xf]
    %v552 = vld [vmem:[%s8 + $0x10] sm:$0xf]
    %v553 = vld [vmem:[%s8 + $0x14] sm:$0xf]
    %v554 = vld [vmem:[%s8 + $0x18] sm:$0xf]
    %v555 = vld [vmem:[%s8 + $0x1c] sm:$0xf]
    %v556 = vld [vmem:[%s8 + $0x20] sm:$0xf]
    %v557 = vld [vmem:[%s8 + $0x24] sm:$0xf]
    %v558 = vld [vmem:[%s8 + $0x28] sm:$0xf]
    %v559 = vld [vmem:[%s8 + $0x2c] sm:$0xf]
    %v560 = vld [vmem:[%s8 + $0x30] sm:$0xf]
    %v561 = vld [vmem:[%s8 + $0x34] sm:$0xf]
    %v562 = vld [vmem:[%s8 + $0x38] sm:$0xf]
    %v563 = vld [vmem:[%s8 + $0x3c] sm:$0xf]
    %v580 = vunpack.c.l.b16 %v548
    %v581 = vunpack.c.l.b16 %v549
    %v582 = vunpack.c.l.b16 %v550
    %v583 = vunpack.c.l.b16 %v551
    %v584 = vunpack.c.l.b16 %v552
    %v585 = vunpack.c.l.b16 %v553
    %v586 = vunpack.c.l.b16 %v554
    %v587 = vunpack.c.l.b16 %v555
    %v588 = vunpack.c.l.b16 %v556
    %v589 = vunpack.c.l.b16 %v557
    %v590 = vunpack.c.l.b16 %v558
    %v591 = vunpack.c.l.b16 %v559
    %v592 = vunpack.c.l.b16 %v560
    %v593 = vunpack.c.l.b16 %v561
    %v594 = vunpack.c.l.b16 %v562
    %v595 = vunpack.c.l.b16 %v563
    %v596 = vpack.c.b16 %v581, %v580
    %v597 = vpack.c.b16 %v583, %v582
    %v598 = vpack.c.b16 %v585, %v584
    %v599 = vpack.c.b16 %v587, %v586
    %v600 = vpack.c.b16 %v589, %v588
    %v601 = vpack.c.b16 %v591, %v590
    %v602 = vpack.c.b16 %v593, %v592
    %v603 = vpack.c.b16 %v595, %v594
    %612 = vmatprep.subr.bf16.mxu0 0
    %613 = vmatpush1.bf16.msra.mxu0 %v596
    %614 = vmatprep.subr.bf16.mxu0 0
    %615 = vmatpush1.bf16.msra.mxu0 %v597
    %616 = vmatprep.subr.bf16.mxu0 0
    %617 = vmatpush1.bf16.msra.mxu0 %v598
    %618 = vmatprep.subr.bf16.mxu0 0
    %619 = vmatpush1.bf16.msra.mxu0 %v599
    %620 = vmatprep.subr.bf16.mxu0 0
    %621 = vmatpush1.bf16.msra.mxu0 %v600
    %622 = vmatprep.subr.bf16.mxu0 0
    %623 = vmatpush1.bf16.msra.mxu0 %v601
    %624 = vmatprep.subr.bf16.mxu0 0
    %625 = vmatpush1.bf16.msra.mxu0 %v602
    %626 = vmatprep.subr.bf16.mxu0 0
    %627 = vmatpush1.bf16.msra.mxu0 %v603
    %628 = vmatprep.subr.bf16.mxu0 0
    %629 = vmatpush1.bf16.msra.mxu0 0
    %630 = vmatprep.subr.bf16.mxu0 0
    %631 = vmatpush1.bf16.msra.mxu0 0
    %632 = vmatprep.subr.bf16.mxu0 0
    %633 = vmatpush1.bf16.msra.mxu0 0
    %634 = vmatprep.subr.bf16.mxu0 0
    %635 = vmatpush1.bf16.msra.mxu0 0
    %636 = vmatprep.subr.bf16.mxu0 0
    %637 = vmatpush1.bf16.msra.mxu0 0
    %638 = vmatprep.subr.bf16.mxu0 0
    %639 = vmatpush1.bf16.msra.mxu0 0
    %640 = vmatprep.subr.bf16.mxu0 0
    %641 = vmatpush1.bf16.msra.mxu0 0
    %642 = vmatprep.subr.bf16.mxu0 0
    %643 = vmatpush1.bf16.msra.mxu0 0
    %644 = vmatprep.mubr.bf16.mxu0 0
    %645 = vmatmul.mubr.bf16.gmra.mrb[0].mxu0 %v547
    %v646 = vpop.f32.mrb[0].mxu0
    %v647 = vadd.f32 0.0, %v646
    %v648 = vpop.f32.mrb[0].mxu0
    %v649 = vpop.f32.mrb[0].mxu0
    %v650 = vadd.f32 0.0, %v649
    %v651 = vpop.f32.mrb[0].mxu0
    %652 = vdwg.mxu0
    %v653 = vpack.c.bf16 %v650, %v647
    %v654 = vld [vmem:[%s11] sm:$0xf]
    %v655 = vld [vmem:[%s11 + $0x4] sm:$0xf]
    %v656 = vld [vmem:[%s11 + $0x8] sm:$0xf]
    %v657 = vld [vmem:[%s11 + $0xc] sm:$0xf]
    %v658 = vld [vmem:[%s11 + $0x10] sm:$0xf]
    %v659 = vld [vmem:[%s11 + $0x14] sm:$0xf]
    %v660 = vld [vmem:[%s11 + $0x18] sm:$0xf]
    %v661 = vld [vmem:[%s11 + $0x1c] sm:$0xf]
    %v662 = vld [vmem:[%s11 + $0x20] sm:$0xf]
    %v663 = vld [vmem:[%s11 + $0x24] sm:$0xf]
    %v664 = vld [vmem:[%s11 + $0x28] sm:$0xf]
    %v665 = vld [vmem:[%s11 + $0x2c] sm:$0xf]
    %v666 = vld [vmem:[%s11 + $0x30] sm:$0xf]
    %v667 = vld [vmem:[%s11 + $0x34] sm:$0xf]
    %v668 = vld [vmem:[%s11 + $0x38] sm:$0xf]
    %v669 = vld [vmem:[%s11 + $0x3c] sm:$0xf]
    %v670 = vld [vmem:[%s12] sm:$0x1]
    %v671 = vunpack.c.l.bf16 %v670
    %v672 = vlaneseq
    %v673 = vshrl.u32 %v672, 7
    %v674 = vsub.s32 0, %v673
    %v675 = vrot.slane %v671, %v674
    %v692 = vunpack.c.l.b16 %v654
    %v693 = vunpack.c.l.b16 %v655
    %v694 = vunpack.c.l.b16 %v656
    %v695 = vunpack.c.l.b16 %v657
    %v696 = vunpack.c.l.b16 %v658
    %v697 = vunpack.c.l.b16 %v659
    %v698 = vunpack.c.l.b16 %v660
    %v699 = vunpack.c.l.b16 %v661
    %v700 = vunpack.c.l.b16 %v662
    %v701 = vunpack.c.l.b16 %v663
    %v702 = vunpack.c.l.b16 %v664
    %v703 = vunpack.c.l.b16 %v665
    %v704 = vunpack.c.l.b16 %v666
    %v705 = vunpack.c.l.b16 %v667
    %v706 = vunpack.c.l.b16 %v668
    %v707 = vunpack.c.l.b16 %v669
    %v708 = vpack.c.b16 %v693, %v692
    %v709 = vpack.c.b16 %v695, %v694
    %v710 = vpack.c.b16 %v697, %v696
    %v711 = vpack.c.b16 %v699, %v698
    %v712 = vpack.c.b16 %v701, %v700
    %v713 = vpack.c.b16 %v703, %v702
    %v714 = vpack.c.b16 %v705, %v704
    %v715 = vpack.c.b16 %v707, %v706
    %724 = vmatprep.subr.bf16.mxu0 0
    %725 = vmatpush1.bf16.msra.mxu0 %v708
    %726 = vmatprep.subr.bf16.mxu0 0
    %727 = vmatpush1.bf16.msra.mxu0 %v709
    %728 = vmatprep.subr.bf16.mxu0 0
    %729 = vmatpush1.bf16.msra.mxu0 %v710
    %730 = vmatprep.subr.bf16.mxu0 0
    %731 = vmatpush1.bf16.msra.mxu0 %v711
    %732 = vmatprep.subr.bf16.mxu0 0
    %733 = vmatpush1.bf16.msra.mxu0 %v712
    %734 = vmatprep.subr.bf16.mxu0 0
    %735 = vmatpush1.bf16.msra.mxu0 %v713
    %736 = vmatprep.subr.bf16.mxu0 0
    %737 = vmatpush1.bf16.msra.mxu0 %v714
    %738 = vmatprep.subr.bf16.mxu0 0
    %739 = vmatpush1.bf16.msra.mxu0 %v715
    %740 = vmatprep.subr.bf16.mxu0 0
    %741 = vmatpush1.bf16.msra.mxu0 0
    %742 = vmatprep.subr.bf16.mxu0 0
    %743 = vmatpush1.bf16.msra.mxu0 0
    %744 = vmatprep.subr.bf16.mxu0 0
    %745 = vmatpush1.bf16.msra.mxu0 0
    %746 = vmatprep.subr.bf16.mxu0 0
    %747 = vmatpush1.bf16.msra.mxu0 0
    %748 = vmatprep.subr.bf16.mxu0 0
    %749 = vmatpush1.bf16.msra.mxu0 0
    %750 = vmatprep.subr.bf16.mxu0 0
    %751 = vmatpush1.bf16.msra.mxu0 0
    %752 = vmatprep.subr.bf16.mxu0 0
    %753 = vmatpush1.bf16.msra.mxu0 0
    %754 = vmatprep.subr.bf16.mxu0 0
    %755 = vmatpush1.bf16.msra.mxu0 0
    %756 = vmatprep.mubr.bf16.mxu0 0
    %757 = vmatmul.mubr.bf16.gmra.mrb[0].mxu0 %v653
    %v758 = vpop.f32.mrb[0].mxu0
    %v759 = vadd.f32 %v675, %v758
    %v760 = vpop.f32.mrb[0].mxu0
    %v761 = vpop.f32.mrb[0].mxu0
    %v762 = vadd.f32 %v675, %v761
    %v763 = vpop.f32.mrb[0].mxu0
    %764 = vdwg.mxu0
    %v765 = vmul.f32 %v759, %v759
    %v766 = vmul.f32 %v762, %v762
    %v767 = vmul.f32 %v759, %v765
    %v768 = vmul.f32 %v762, %v766
    %v769 = vmul.f32 %v767, 0.044715
    %v770 = vmul.f32 %v768, 0.044715
    %v771 = vadd.f32 %v759, %v769
    %v772 = vadd.f32 %v762, %v770
    %v773 = vmul.f32 %v771, 0.7978846
    %v774 = vmul.f32 %v772, 0.7978846
    %v775 = vtanh.pop %v773
    %v776 = vtanh.pop %v774
    %v777 = vadd.f32 %v775, 1.0
    %v778 = vadd.f32 %v776, 1.0
    %v779 = vmul.f32 %v777, 0.5
    %v780 = vmul.f32 %v778, 0.5
    %v781 = vmul.f32 %v759, %v779
    %v782 = vmul.f32 %v762, %v780
    %v783 = vpack.c.bf16 %v782, %v781
    %v784 = vld [vmem:[%s13] sm:$0xf]
    %v785 = vld [vmem:[%s13 + $0x4] sm:$0xf]
    %v786 = vld [vmem:[%s13 + $0x8] sm:$0xf]
    %v787 = vld [vmem:[%s13 + $0xc] sm:$0xf]
    %v788 = vld [vmem:[%s13 + $0x10] sm:$0xf]
    %v789 = vld [vmem:[%s13 + $0x14] sm:$0xf]
    %v790 = vld [vmem:[%s13 + $0x18] sm:$0xf]
    %v791 = vld [vmem:[%s13 + $0x1c] sm:$0xf]
    %v792 = vld [vmem:[%s13 + $0x20] sm:$0xf]
    %v793 = vld [vmem:[%s13 + $0x24] sm:$0xf]
    %v794 = vld [vmem:[%s13 + $0x28] sm:$0xf]
    %v795 = vld [vmem:[%s13 + $0x2c] sm:$0xf]
    %v796 = vld [vmem:[%s13 + $0x30] sm:$0xf]
    %v797 = vld [vmem:[%s13 + $0x34] sm:$0xf]
    %v798 = vld [vmem:[%s13 + $0x38] sm:$0xf]
    %v799 = vld [vmem:[%s13 + $0x3c] sm:$0xf]
    %v800 = vld [vmem:[%s14] sm:$0x1]
    %v801 = vunpack.c.l.bf16 %v800
    %v802 = vlaneseq
    %v803 = vshrl.u32 %v802, 7
    %v804 = vsub.s32 0, %v803
    %v805 = vrot.slane %v801, %v804
    %v822 = vunpack.c.l.b16 %v784
    %v823 = vunpack.c.l.b16 %v785
    %v824 = vunpack.c.l.b16 %v786
    %v825 = vunpack.c.l.b16 %v787
    %v826 = vunpack.c.l.b16 %v788
    %v827 = vunpack.c.l.b16 %v789
    %v828 = vunpack.c.l.b16 %v790
    %v829 = vunpack.c.l.b16 %v791
    %v830 = vunpack.c.l.b16 %v792
    %v831 = vunpack.c.l.b16 %v793
    %v832 = vunpack.c.l.b16 %v794
    %v833 = vunpack.c.l.b16 %v795
    %v834 = vunpack.c.l.b16 %v796
    %v835 = vunpack.c.l.b16 %v797
    %v836 = vunpack.c.l.b16 %v798
    %v837 = vunpack.c.l.b16 %v799
    %v838 = vpack.c.b16 %v823, %v822
    %v839 = vpack.c.b16 %v825, %v824
    %v840 = vpack.c.b16 %v827, %v826
    %v841 = vpack.c.b16 %v829, %v828
    %v842 = vpack.c.b16 %v831, %v830
    %v843 = vpack.c.b16 %v833, %v832
    %v844 = vpack.c.b16 %v835, %v834
    %v845 = vpack.c.b16 %v837, %v836
    %854 = vmatprep.subr.bf16.mxu0 0
    %855 = vmatpush1.bf16.msra.mxu0 %v838
    %856 = vmatprep.subr.bf16.mxu0 0
    %857 = vmatpush1.bf16.msra.mxu0 %v839
    %858 = vmatprep.subr.bf16.mxu0 0
    %859 = vmatpush1.bf16.msra.mxu0 %v840
    %860 = vmatprep.subr.bf16.mxu0 0
    %861 = vmatpush1.bf16.msra.mxu0 %v841
    %862 = vmatprep.subr.bf16.mxu0 0
    %863 = vmatpush1.bf16.msra.mxu0 %v842
    %864 = vmatprep.subr.bf16.mxu0 0
    %865 = vmatpush1.bf16.msra.mxu0 %v843
    %866 = vmatprep.subr.bf16.mxu0 0
    %867 = vmatpush1.bf16.msra.mxu0 %v844
    %868 = vmatprep.subr.bf16.mxu0 0
    %869 = vmatpush1.bf16.msra.mxu0 %v845
    %870 = vmatprep.subr.bf16.mxu0 0
    %871 = vmatpush1.bf16.msra.mxu0 0
    %872 = vmatprep.subr.bf16.mxu0 0
    %873 = vmatpush1.bf16.msra.mxu0 0
    %874 = vmatprep.subr.bf16.mxu0 0
    %875 = vmatpush1.bf16.msra.mxu0 0
    %876 = vmatprep.subr.bf16.mxu0 0
    %877 = vmatpush1.bf16.msra.mxu0 0
    %878 = vmatprep.subr.bf16.mxu0 0
    %879 = vmatpush1.bf16.msra.mxu0 0
    %880 = vmatprep.subr.bf16.mxu0 0
    %881 = vmatpush1.bf16.msra.mxu0 0
    %882 = vmatprep.subr.bf16.mxu0 0
    %883 = vmatpush1.bf16.msra.mxu0 0
    %884 = vmatprep.subr.bf16.mxu0 0
    %885 = vmatpush1.bf16.msra.mxu0 0
    %886 = vmatprep.mubr.bf16.mxu0 0
    %887 = vmatmul.mubr.bf16.gmra.mrb[0].mxu0 %v783
    %v888 = vpop.f32.mrb[0].mxu0
    %v889 = vadd.f32 %v805, %v888
    %v890 = vpop.f32.mrb[0].mxu0
    %v891 = vpop.f32.mrb[0].mxu0
    %v892 = vadd.f32 %v805, %v891
    %v893 = vpop.f32.mrb[0].mxu0
    %894 = vdwg.mxu0
    %v895 = vadd.f32 %v889, %v647
    %v896 = vadd.f32 %v892, %v650
    %897 = vst [vmem:[%s19] sm:$0xff] %v895
    %898 = vst [vmem:[%s19 + $0x8] sm:$0xff] %v896
    %v899 = vpack.c.bf16 %v896, %v895
    %v900 = vld [vmem:[%s15] sm:$0xf]
    %v901 = vld [vmem:[%s15 + $0x4] sm:$0xf]
    %v902 = vld [vmem:[%s15 + $0x8] sm:$0xf]
    %v903 = vld [vmem:[%s15 + $0xc] sm:$0xf]
    %v904 = vld [vmem:[%s15 + $0x10] sm:$0xf]
    %v905 = vld [vmem:[%s15 + $0x14] sm:$0xf]
    %v906 = vld [vmem:[%s15 + $0x18] sm:$0xf]
    %v907 = vld [vmem:[%s15 + $0x1c] sm:$0xf]
    %v908 = vld [vmem:[%s15 + $0x20] sm:$0xf]
    %v909 = vld [vmem:[%s15 + $0x24] sm:$0xf]
    %v910 = vld [vmem:[%s15 + $0x28] sm:$0xf]
    %v911 = vld [vmem:[%s15 + $0x2c] sm:$0xf]
    %v912 = vld [vmem:[%s15 + $0x30] sm:$0xf]
    %v913 = vld [vmem:[%s15 + $0x34] sm:$0xf]
    %v914 = vld [vmem:[%s15 + $0x38] sm:$0xf]
    %v915 = vld [vmem:[%s15 + $0x3c] sm:$0xf]
    %v916 = vld [vmem:[%s16] sm:$0x1]
    %v918 = vlaneseq
    %v919 = vshrl.u32 %v918, 7
    %v920 = vsub.s32 0, %v919
    %v921 = vrot.slane %v916, %v920
    %v939 = vunpack.c.l.b16 %v900
    %v940 = vunpack.c.l.b16 %v901
    %v941 = vunpack.c.l.b16 %v902
    %v942 = vunpack.c.l.b16 %v903
    %v943 = vunpack.c.l.b16 %v904
    %v944 = vunpack.c.l.b16 %v905
    %v945 = vunpack.c.l.b16 %v906
    %v946 = vunpack.c.l.b16 %v907
    %v947 = vunpack.c.l.b16 %v908
    %v948 = vunpack.c.l.b16 %v909
    %v949 = vunpack.c.l.b16 %v910
    %v950 = vunpack.c.l.b16 %v911
    %v951 = vunpack.c.l.b16 %v912
    %v952 = vunpack.c.l.b16 %v913
    %v953 = vunpack.c.l.b16 %v914
    %v954 = vunpack.c.l.b16 %v915
    %v955 = vpack.c.b16 %v940, %v939
    %v956 = vpack.c.b16 %v942, %v941
    %v957 = vpack.c.b16 %v944, %v943
    %v958 = vpack.c.b16 %v946, %v945
    %v959 = vpack.c.b16 %v948, %v947
    %v960 = vpack.c.b16 %v950, %v949
    %v961 = vpack.c.b16 %v952, %v951
    %v962 = vpack.c.b16 %v954, %v953
    %971 = vmatprep.subr.bf16.mxu0 0
    %972 = vmatpush1.bf16.msra.mxu0 %v955
    %973 = vmatprep.subr.bf16.mxu0 0
    %974 = vmatpush1.bf16.msra.mxu0 %v956
    %975 = vmatprep.subr.bf16.mxu0 0
    %976 = vmatpush1.bf16.msra.mxu0 %v957
    %977 = vmatprep.subr.bf16.mxu0 0
    %978 = vmatpush1.bf16.msra.mxu0 %v958
    %979 = vmatprep.subr.bf16.mxu0 0
    %980 = vmatpush1.bf16.msra.mxu0 %v959
    %981 = vmatprep.subr.bf16.mxu0 0
    %982 = vmatpush1.bf16.msra.mxu0 %v960
    %983 = vmatprep.subr.bf16.mxu0 0
    %984 = vmatpush1.bf16.msra.mxu0 %v961
    %985 = vmatprep.subr.bf16.mxu0 0
    %986 = vmatpush1.bf16.msra.mxu0 %v962
    %987 = vmatprep.subr.bf16.mxu0 0
    %988 = vmatpush1.bf16.msra.mxu0 0
    %989 = vmatprep.subr.bf16.mxu0 0
    %990 = vmatpush1.bf16.msra.mxu0 0
    %991 = vmatprep.subr.bf16.mxu0 0
    %992 = vmatpush1.bf16.msra.mxu0 0
    %993 = vmatprep.subr.bf16.mxu0 0
    %994 = vmatpush1.bf16.msra.mxu0 0
    %995 = vmatprep.subr.bf16.mxu0 0
    %996 = vmatpush1.bf16.msra.mxu0 0
    %997 = vmatprep.subr.bf16.mxu0 0
    %998 = vmatpush1.bf16.msra.mxu0 0
    %999 = vmatprep.subr.bf16.mxu0 0
    %1000 = vmatpush1.bf16.msra.mxu0 0
    %1001 = vmatprep.subr.bf16.mxu0 0
    %1002 = vmatpush1.bf16.msra.mxu0 0
    %1003 = vmatprep.mubr.bf16.mxu0 0
    %1004 = vmatmul.mubr.bf16.gmra.mrb[0].mxu0 %v899
    %v1005 = vpop.f32.mrb[0].mxu0
    %v1006 = vadd.f32 %v921, %v1005
    %v1007 = vpop.f32.mrb[0].mxu0
    %v1008 = vpop.f32.mrb[0].mxu0
    %v1009 = vadd.f32 %v921, %v1008
    %v1010 = vpop.f32.mrb[0].mxu0
    %1011 = vdwg.mxu0
    %1012 = vst [vmem:[%s20] sm:$0xff] %v1006
    %1013 = vst [vmem:[%s20 + $0x8] sm:$0xff] %v1009
    %v1014 = vld [vmem:[%s10] sm:$0xff]
    %v1015 = vld [vmem:[%s10 + $0x8] sm:$0xff]
    %1016 = vmax.xlane.f32.xlu0 %v1006
    %v1017 = vpop.xlane.xlu0 %1016
    %1018 = vmax.xlane.f32.xlu0 %v1009
    %v1019 = vpop.xlane.xlu0 %1018
    %v1020 = vsub.f32 %v1006, %v1017
    %v1021 = vsub.f32 %v1009, %v1019
    %v1022 = vmul.f32 %v1020, 1.442695
    %v1023 = vpow.pop %v1022
    %v1024 = vmul.f32 %v1021, 1.442695
    %v1025 = vpow.pop %v1024
    %1026 = vadd.xlane.f32.xlu0 %v1023
    %v1027 = vpop.xlane.xlu0 %1026
    %1028 = vadd.xlane.f32.xlu0 %v1025
    %v1029 = vpop.xlane.xlu0 %1028
    %v1030 = vlog2.pop %v1027
    %v1031 = vmul.f32 %v1030, 0.6931472
    %v1032 = vlog2.pop %v1029
    %v1033 = vmul.f32 %v1032, 0.6931472
    %v1034 = vadd.f32 %v1031, %v1017
    %v1035 = vadd.f32 %v1033, %v1019
    %1036 = vset.pattern.permute.xlu0 0
    %1037 = vperm.xlu0 %1036, %v1014
    %v1038 = vpop.permute.xlu0 %1037
    %1039 = vset.pattern.permute.xlu0 0
    %1040 = vperm.xlu0 %1039, %v1015
    %v1041 = vpop.permute.xlu0 %1040
    %vm1042 = vcmp.eq.s32.totalorder %v534, %v1038
    %vm1043 = vcmp.eq.s32.totalorder %v534, %v1041
    %v1044 = vsel %vm1042, %v1006, 0.0
    %v1045 = vsel %vm1043, %v1009, 0.0
    %1046 = vadd.xlane.f32.xlu0 %v1044
    %v1047 = vpop.xlane.xlu0 %1046
    %1048 = vadd.xlane.f32.xlu0 %v1045
    %v1049 = vpop.xlane.xlu0 %1048
    %vm1050 = vcmp.ge.s32.totalorder %v1014, 0
    %vm1051 = vcmp.ge.s32.totalorder %v1015, 0
    %v1052 = vsel %vm1050, 1, 0
    %v1053 = vsel %vm1051, 1, 0
    %v1054 = vcvt.s32.f32 %v1052
    %v1055 = vcvt.s32.f32 %v1053
    %v1056 = vsub.f32 %v1034, %v1047
    %v1057 = vsub.f32 %v1035, %v1049
    %v1058 = vmul.f32 %v1054, %v1056
    %v1059 = vmul.f32 %v1055, %v1057
    %vm1060 = vcmask 7168
    %v1061 = vsel %vm1060, %v1054, 0.0
    %v1062 = vsel %vm1060, %v1055, 0.0
    %v1063 = vadd.f32 %v1061, %v1062
    %v1064 = vrot.slane %v1063, 4
    %v1065 = vadd.f32 %v1063, %v1064
    %v1066 = vrot.slane %v1065, 2
    %v1067 = vadd.f32 %v1065, %v1066
    %v1068 = vrot.slane %v1067, 1
    %v1069 = vadd.f32 %v1067, %v1068
    %v1070 = vsel %vm1060, %v1058, 0.0
    %v1071 = vsel %vm1060, %v1059, 0.0
    %v1072 = vadd.f32 %v1070, %v1071
    %v1073 = vrot.slane %v1072, 4
    %v1074 = vadd.f32 %v1072, %v1073
    %v1075 = vrot.slane %v1074, 2
    %v1076 = vadd.f32 %v1074, %v1075
    %v1077 = vrot.slane %v1076, 1
    %v1078 = vadd.f32 %v1076, %v1077
    %v1079 = vmax.f32 %v1069, 1.0
    %v1080 = vrcp.pop %v1079
    %v1081 = vmul.f32 %v1078, %v1080
    %vm1082 = vcmask 0
    %1083 = vst.msk [vmem:[#allocation4] sm:$0x1] %vm1082, %v1081
    %s1084 = sld [smem:[#allocation3]]
    %s1085 = scalar_lea.vmem %s19, %s1084
    %v1086 = vld [vmem:[%s1085] sm:$0x1]
    %s1087 = sld [smem:[#allocation3 + $0x1]]
    %s1088 = scalar_lea.vmem %s19, %s1087
    %v1089 = vld [vmem:[%s1088] sm:$0x1]
    %v1091 = vrot.slane %v1089, 7
    %v1093 = vsel %vm396, %v1086, %v1091
    %v1094 = vsel %vm398, %v1093, 0.0
    %v1095 = vpack.c.bf16 %v1094, %v1094
    %v1096 = vld [vmem:[%s17] sm:$0xf]
    %v1097 = vld [vmem:[%s17 + $0x4] sm:$0xf]
    %v1098 = vld [vmem:[%s17 + $0x8] sm:$0xf]
    %v1099 = vld [vmem:[%s17 + $0xc] sm:$0xf]
    %v1100 = vld [vmem:[%s17 + $0x10] sm:$0xf]
    %v1101 = vld [vmem:[%s17 + $0x14] sm:$0xf]
    %v1102 = vld [vmem:[%s17 + $0x18] sm:$0xf]
    %v1103 = vld [vmem:[%s17 + $0x1c] sm:$0xf]
    %v1104 = vld [vmem:[%s17 + $0x20] sm:$0xf]
    %v1105 = vld [vmem:[%s17 + $0x24] sm:$0xf]
    %v1106 = vld [vmem:[%s17 + $0x28] sm:$0xf]
    %v1107 = vld [vmem:[%s17 + $0x2c] sm:$0xf]
    %v1108 = vld [vmem:[%s17 + $0x30] sm:$0xf]
    %v1109 = vld [vmem:[%s17 + $0x34] sm:$0xf]
    %v1110 = vld [vmem:[%s17 + $0x38] sm:$0xf]
    %v1111 = vld [vmem:[%s17 + $0x3c] sm:$0xf]
    %v1112 = vld [vmem:[%s18] sm:$0x1]
    %v1113 = vunpack.c.l.bf16 %v1112
    %v1114 = vlaneseq
    %v1115 = vshrl.u32 %v1114, 7
    %v1116 = vsub.s32 0, %v1115
    %v1117 = vrot.slane %v1113, %v1116
    %v1134 = vunpack.c.l.b16 %v1096
    %v1135 = vunpack.c.l.b16 %v1097
    %v1136 = vunpack.c.l.b16 %v1098
    %v1137 = vunpack.c.l.b16 %v1099
    %v1138 = vunpack.c.l.b16 %v1100
    %v1139 = vunpack.c.l.b16 %v1101
    %v1140 = vunpack.c.l.b16 %v1102
    %v1141 = vunpack.c.l.b16 %v1103
    %v1142 = vunpack.c.l.b16 %v1104
    %v1143 = vunpack.c.l.b16 %v1105
    %v1144 = vunpack.c.l.b16 %v1106
    %v1145 = vunpack.c.l.b16 %v1107
    %v1146 = vunpack.c.l.b16 %v1108
    %v1147 = vunpack.c.l.b16 %v1109
    %v1148 = vunpack.c.l.b16 %v1110
    %v1149 = vunpack.c.l.b16 %v1111
    %v1150 = vpack.c.b16 %v1135, %v1134
    %v1151 = vpack.c.b16 %v1137, %v1136
    %v1152 = vpack.c.b16 %v1139, %v1138
    %v1153 = vpack.c.b16 %v1141, %v1140
    %v1154 = vpack.c.b16 %v1143, %v1142
    %v1155 = vpack.c.b16 %v1145, %v1144
    %v1156 = vpack.c.b16 %v1147, %v1146
    %v1157 = vpack.c.b16 %v1149, %v1148
    %1166 = vmatprep.subr.bf16.mxu0 0
    %1167 = vmatpush1.bf16.msra.mxu0 %v1150
    %1168 = vmatprep.subr.bf16.mxu0 0
    %1169 = vmatpush1.bf16.msra.mxu0 %v1151
    %1170 = vmatprep.subr.bf16.mxu0 0
    %1171 = vmatpush1.bf16.msra.mxu0 %v1152
    %1172 = vmatprep.subr.bf16.mxu0 0
    %1173 = vmatpush1.bf16.msra.mxu0 %v1153
    %1174 = vmatprep.subr.bf16.mxu0 0
    %1175 = vmatpush1.bf16.msra.mxu0 %v1154
    %1176 = vmatprep.subr.bf16.mxu0 0
    %1177 = vmatpush1.bf16.msra.mxu0 %v1155
    %1178 = vmatprep.subr.bf16.mxu0 0
    %1179 = vmatpush1.bf16.msra.mxu0 %v1156
    %1180 = vmatprep.subr.bf16.mxu0 0
    %1181 = vmatpush1.bf16.msra.mxu0 %v1157
    %1182 = vmatprep.subr.bf16.mxu0 0
    %1183 = vmatpush1.bf16.msra.mxu0 0
    %1184 = vmatprep.subr.bf16.mxu0 0
    %1185 = vmatpush1.bf16.msra.mxu0 0
    %1186 = vmatprep.subr.bf16.mxu0 0
    %1187 = vmatpush1.bf16.msra.mxu0 0
    %1188 = vmatprep.subr.bf16.mxu0 0
    %1189 = vmatpush1.bf16.msra.mxu0 0
    %1190 = vmatprep.subr.bf16.mxu0 0
    %1191 = vmatpush1.bf16.msra.mxu0 0
    %1192 = vmatprep.subr.bf16.mxu0 0
    %1193 = vmatpush1.bf16.msra.mxu0 0
    %1194 = vmatprep.subr.bf16.mxu0 0
    %1195 = vmatpush1.bf16.msra.mxu0 0
    %1196 = vmatprep.subr.bf16.mxu0 0
    %1197 = vmatpush1.bf16.msra.mxu0 0
    %1198 = vmatprep.mubr.bf16.mxu0 0
    %1199 = vmatmul.mubr.bf16.gmra.mrb[0].mxu0 %v1095
    %v1200 = vpop.f32.mrb[0].mxu0
    %v1201 = vadd.f32 %v1117, %v1200
    %v1202 = vpop.f32.mrb[0].mxu0
    %v1203 = vpop.f32.mrb[0].mxu0
    %v1204 = vpop.f32.mrb[0].mxu0
    %1205 = vdwg.mxu0
    %v1206 = vmul.f32 %v1201, %v1201
    %1207 = vadd.xlane.f32.xlu0 %v1206
    %v1208 = vpop.xlane.xlu0 %1207
    %v1209 = vadd.f32 %v1208, 1e-12
    %v1210 = vrsqrt.pop %v1209
    %v1211 = vmul.f32 %v1201, %v1210
    %1212 = vst [vmem:[#allocation6] sm:$0x3] %v1211
    // Predicated region
    $region74: #{fromage_forward.1} parent=1 // pred_check
      _
    $region75: #{fromage_forward.1} parent=1 // pred_check_branch
      %1214 = sbr.rel (0) target = $region77
    $region76: #{fromage_forward.1} parent=1 // pred_region
      _
    $region77: #{fromage_forward.1} parent=1 // pred_fallthru
      _
    // Predicated region
    $region78: #{fromage_forward.1} parent=1 // pred_check
      _
    $region79: #{fromage_forward.1} parent=1 // pred_check_branch
      %1216 = sbr.rel (0) target = $region81
    $region80: #{fromage_forward.1} parent=1 // pred_region
      _
    $region81: #{fromage_forward.1} parent=1 // pred_fallthru
      _
    // Predicated region
    $region82: #{fromage_forward.1} parent=1 // pred_check
      _
    $region83: #{fromage_forward.1} parent=1 // pred_check_branch
      %1218 = sbr.rel (0) target = $region85
    $region84: #{fromage_forward.1} parent=1 // pred_region
      %s1220 = ssub.s32 16, 16
      %1221 = vsyncadd [#allocation5], %s1220
      %s1223 = sshll.u32 [#allocation4], 4
      %s1224 = int_to_ptr.vmem [resolvable:$true] %s1223
      %1226 = dma.vmem_to_hbm [thread:$0]  %s1224, 16, %s21, [#allocation5]
    $region85: #{fromage_forward.1} parent=1 // pred_fallthru
      _
    // Predicated region
    $region86: #{fromage_forward.1} parent=1 // pred_check
      _
    $region87: #{fromage_forward.1} parent=1 // pred_check_branch
      %1228 = sbr.rel (0) target = $region89
    $region88: #{fromage_forward.1} parent=1 // pred_region
      _
    $region89: #{fromage_forward.1} parent=1 // pred_fallthru
      _
    // Predicated region
    $region90: #{fromage_forward.1} parent=1 // pred_check
      _
    $region91: #{fromage_forward.1} parent=1 // pred_check_branch
      %1230 = sbr.rel (0) target = $region93
    $region92: #{fromage_forward.1} parent=1 // pred_region
      %s1232 = ssub.s32 32, 32
      %1233 = vsyncadd [#allocation7], %s1232
      %s1235 = sshll.u32 [#allocation6], 4
      %s1236 = int_to_ptr.vmem [resolvable:$true] %s1235
      %1238 = dma.vmem_to_hbm [thread:$0]  %s1236, 32, %s23, [#allocation7]
    $region93: #{fromage_forward.1} parent=1 // pred_fallthru
      _
    // Predicated region
    $region94: #{fromage_forward.1} parent=1 // pred_check
      _
    $region95: #{fromage_forward.1} parent=1 // pred_check_branch
      %1240 = sbr.rel (0) target = $region97
    $region96: #{fromage_forward.1} parent=1 // pred_region
      _
    $region97: #{fromage_forward.1} parent=1 // pred_fallthru
      _
    // Predicated region
    $region98: #{fromage_forward.1} parent=1 // pred_check
      _
    $region99: #{fromage_forward.1} parent=1 // pred_check_branch
      %1242 = sbr.rel (0) target = $region101
    $region100: #{fromage_forward.1} parent=1 // pred_region
      _
    $region101: #{fromage_forward.1} parent=1 // pred_fallthru
      _
    // Predicated region
    $region102: #{fromage_forward.1} parent=1 // pred_check
      _
    $region103: #{fromage_forward.1} parent=1 // pred_check_branch
      %1244 = sbr.rel (0) target = $region105
    $region104: #{fromage_forward.1} parent=1 // pred_region
      %1245 = dma.done [#allocation5], 16
    $region105: #{fromage_forward.1} parent=1 // pred_fallthru
      _
    // Predicated region
    $region106: #{fromage_forward.1} parent=1 // pred_check
      _
    $region107: #{fromage_forward.1} parent=1 // pred_check_branch
      %1247 = sbr.rel (0) target = $region109
    $region108: #{fromage_forward.1} parent=1 // pred_region
      _
    $region109: #{fromage_forward.1} parent=1 // pred_fallthru
      _
    // Predicated region
    $region110: #{fromage_forward.1} parent=1 // pred_check
      _
    $region111: #{fromage_forward.1} parent=1 // pred_check_branch
      %1249 = sbr.rel (0) target = $region113
    $region112: #{fromage_forward.1} parent=1 // pred_region
      %1250 = dma.done [#allocation7], 32
    $region113: #{fromage_forward.1} parent=1 // pred_fallthru
      _
    %1251 = vsyncpa [#allocation5], 1
    %1252 = vsyncpa [#allocation7], 1

</llo_original>
